<compile_context>
chip_gen: v6e
topology: v6e:2x2x1
jax: 0.10.0
libtpu: 0.0.40
codegen_flags: <defaults>
</compile_context>

<pallas_src>
import functools

import jax
import jax.numpy as jnp
from jax import lax
from jax.experimental import pallas as pl
from jax.experimental.pallas import tpu as pltpu

LATENT = 32
HIDDEN = 32
LANE = 128        # lane-dense padded feature width
TILE_E = 512      # edge-tile rows when a graph needs tiling (multiple of 128)


def _round_up(x, m):
    return (x + m - 1) // m * m


def _pad2(x, rows, cols):
    r, c = x.shape
    return jnp.pad(x, ((0, rows - r), (0, cols - c)))


# --------------------------- fully-fused processor kernel ---------------------------

def _fused_proc_kernel(s_col_ref, r_col_ref, r_rows_ref, node_in_ref, ef_in_ref,
                       w1s_ref, w1r_ref, w1e_ref, b1e_ref, w2e_ref, b2e_ref,
                       w1n_ref, b1n_ref, w2n_ref, b2n_ref,
                       nout_ref, eout_ref, cat_ref,
                       *, n_valid, tile_e, n_tiles):
    step = pl.program_id(0)

    # Initialise the VMEM-resident carries once (step 0 of the grid).
    @pl.when(step == 0)
    def _():
        nout_ref[...] = node_in_ref[...]
        eout_ref[...] = ef_in_ref[...]

    nodes = nout_ref[...]                     # pre-update node features (carry)
    n_pad = nodes.shape[0]

    # Reassociated gather: (one_hot @ nodes) @ W1 == one_hot @ (nodes @ W1).
    nw1s = jnp.dot(nodes, w1s_ref[...], preferred_element_type=jnp.float32)
    nw1r = jnp.dot(nodes, w1r_ref[...], preferred_element_type=jnp.float32)
    w1e = w1e_ref[...]
    b1e = b1e_ref[...]
    w2e = w2e_ref[...]
    b2e = b2e_ref[...]

    # cat_ref = [nodes | agg]; agg half zeroed, then scatter-accumulated.
    cat_ref[:, pl.ds(0, LANE)] = nodes
    cat_ref[:, pl.ds(LANE, LANE)] = jnp.zeros((n_pad, LANE), jnp.float32)

    @pl.loop(0, n_tiles)
    def _(t):
        off = pl.multiple_of(t * tile_e, tile_e)
        sc = s_col_ref[pl.ds(off, tile_e), :]                 # [te, 1] senders
        rc = r_col_ref[pl.ds(off, tile_e), :]                 # [te, 1] receivers
        ef = eout_ref[pl.ds(off, tile_e), :]                  # [te, LANE] carry
        iota_n = lax.broadcasted_iota(jnp.int32, (tile_e, n_pad), 1)
        oh_s = (sc == iota_n).astype(jnp.float32)             # sender one-hot
        oh_r = (rc == iota_n).astype(jnp.float32)             # receiver one-hot
        h = (jnp.dot(oh_s, nw1s, preferred_element_type=jnp.float32)
             + jnp.dot(oh_r, nw1r, preferred_element_type=jnp.float32)
             + jnp.dot(ef, w1e, preferred_element_type=jnp.float32)
             + b1e)
        h = jnp.maximum(h, 0.0)
        upd = jnp.dot(h, w2e, preferred_element_type=jnp.float32) + b2e
        eout_ref[pl.ds(off, tile_e), :] = upd + ef            # residual edge carry
        # scatter-add by receiver; padded edges carry receiver == n_pad -> no hit
        rr = r_rows_ref[pl.ds(t, 1), :]                       # [1, te]
        oh_rt = (lax.broadcasted_iota(jnp.int32, (n_pad, tile_e), 0) == rr
                 ).astype(jnp.float32)                        # [n_pad, te]
        cat_ref[:, pl.ds(LANE, LANE)] += jnp.dot(
            oh_rt, upd, preferred_element_type=jnp.float32)

    # Node MLP: one K=2*LANE matmul over [nodes | agg] with pre-concatenated W1.
    cat = cat_ref[...]
    hn = jnp.maximum(
        jnp.dot(cat, w1n_ref[...], preferred_element_type=jnp.float32)
        + b1n_ref[...], 0.0)
    new_nodes = (jnp.dot(hn, w2n_ref[...], preferred_element_type=jnp.float32)
                 + b2n_ref[...] + nodes)                      # residual
    # keep padded node rows exactly zero so the carry stays clean across steps
    row_ok = lax.broadcasted_iota(jnp.int32, (n_pad, 1), 0) < n_valid
    nout_ref[...] = jnp.where(row_ok, new_nodes, 0.0)


def _vmem_limit_bytes(n_pad, e_pad, te):
    est = 4 * (8 * n_pad * LANE          # node carries, cat scratch, nw1s/nw1r
               + 6 * e_pad * LANE        # edge in/out buffers + index columns
               + 8 * te * n_pad          # one-hot intermediates
               + 8 * te * LANE           # edge-tile activations
               + 40 * LANE * LANE)       # double-buffered weights + temps
    return min(max(est + (4 << 20), 32 << 20), 48 << 20)


def processor(node_feats, edge_sets, stacked, *, tile_e=TILE_E):
    if len(edge_sets) != 1:
        # TODO(synk): fold additional edge sets into the fused kernel.
        raise NotImplementedError("fused processor supports a single edge set")
    ef, snd, rcv = edge_sets[0]
    N, L = node_feats.shape
    E = ef.shape[0]
    n_pad = _round_up(max(N, 8), 8)
    te = tile_e if E >= tile_e else _round_up(max(E, 8), 8)
    e_pad = _round_up(E, te)
    n_tiles = e_pad // te

    node_p = _pad2(node_feats, n_pad, LANE)
    ef_p = _pad2(ef, e_pad, LANE)
    s_pad = jnp.pad(snd.astype(jnp.int32), (0, e_pad - E))
    # padded edges get an out-of-range receiver -> excluded from aggregation
    r_pad = jnp.pad(rcv.astype(jnp.int32), (0, e_pad - E), constant_values=n_pad)
    s_col = s_pad.reshape(e_pad, 1)
    r_col = r_pad.reshape(e_pad, 1)
    r_rows = r_pad.reshape(n_tiles, te)      # sublane-indexed rows for scatter

    steps = stacked["W1S"].shape[0]
    weights = (stacked["W1S"], stacked["W1R"], stacked["W1E"], stacked["B1E"],
               stacked["W2E"], stacked["B2E"], stacked["W1N"], stacked["B1N"],
               stacked["W2N"], stacked["B2N"])

    def whole(shape):
        nm = len(shape)
        return pl.BlockSpec(shape, lambda i, _n=nm: (0,) * _n)

    def per_step(arr):
        return pl.BlockSpec((None,) + arr.shape[1:], lambda i: (i, 0, 0))

    in_specs = ([whole((e_pad, 1)), whole((e_pad, 1)), whole((n_tiles, te)),
                 whole((n_pad, LANE)), whole((e_pad, LANE))]
                + [per_step(w) for w in weights])
    out_specs = (whole((n_pad, LANE)), whole((e_pad, LANE)))
    out_shape = (jax.ShapeDtypeStruct((n_pad, LANE), jnp.float32),
                 jax.ShapeDtypeStruct((e_pad, LANE), jnp.float32))

    kernel = functools.partial(_fused_proc_kernel, n_valid=N,
                               tile_e=te, n_tiles=n_tiles)

    nout, eout = pl.pallas_call(
        kernel,
        grid=(steps,),
        in_specs=in_specs,
        out_specs=out_specs,
        out_shape=out_shape,
        scratch_shapes=[pltpu.VMEM((n_pad, 2 * LANE), jnp.float32)],
        compiler_params=pltpu.CompilerParams(
            dimension_semantics=("arbitrary",),           # steps are sequential
            vmem_limit_bytes=_vmem_limit_bytes(n_pad, e_pad, te)),
    )(s_col, r_col, r_rows, node_p, ef_p, *weights)

    return nout[:N, :L], [(eout[:E, :L], snd, rcv)]


# --------------------------- parameter init, split, pad & stack ---------------------------

def init_params(key, message_passing_steps, latent=LATENT, hidden=HIDDEN):
    params = []
    for s in range(message_passing_steps):
        k = jax.random.fold_in(key, s)
        ks = jax.random.split(k, 4)
        edge_mlp = (0.1 * jax.random.normal(ks[0], (3 * latent, hidden), jnp.float32),
                    jnp.zeros((1, hidden), jnp.float32),
                    0.1 * jax.random.normal(ks[1], (hidden, latent), jnp.float32),
                    jnp.zeros((1, latent), jnp.float32))
        node_mlp = (0.1 * jax.random.normal(ks[2], (2 * latent, hidden), jnp.float32),
                    jnp.zeros((1, hidden), jnp.float32),
                    0.1 * jax.random.normal(ks[3], (hidden, latent), jnp.float32),
                    jnp.zeros((1, latent), jnp.float32))
        params.append({"edge_mlps": [edge_mlp], "node_mlp": node_mlp})
    return params


def stack_params(params, latent=LATENT):
    """Split W1 per input block, zero-pad to lane width 128, concat node W1
    (for the single K=256 matmul) and stack everything over steps."""
    lp = hp = LANE
    cols = {k: [] for k in ("W1S", "W1R", "W1E", "B1E", "W2E", "B2E",
                            "W1N", "B1N", "W2N", "B2N")}
    for bp in params:
        w1, b1, w2, b2 = bp["edge_mlps"][0]
        cols["W1S"].append(_pad2(w1[:latent], lp, hp))
        cols["W1R"].append(_pad2(w1[latent:2 * latent], lp, hp))
        cols["W1E"].append(_pad2(w1[2 * latent:], lp, hp))
        cols["B1E"].append(_pad2(b1, 1, hp))
        cols["W2E"].append(_pad2(w2, hp, lp))
        cols["B2E"].append(_pad2(b2, 1, lp))
        w1n, b1n, w2n, b2n = bp["node_mlp"]
        cols["W1N"].append(jnp.concatenate(
            [_pad2(w1n[:latent], lp, hp), _pad2(w1n[latent:], lp, hp)], axis=0))
        cols["B1N"].append(_pad2(b1n, 1, hp))
        cols["W2N"].append(_pad2(w2n, hp, lp))
        cols["B2N"].append(_pad2(b2n, 1, lp))
    return {k: jnp.stack(v, axis=0) for k, v in cols.items()}


# --------------------------- pure-JAX reference (for verification) ---------------------------

def _mlp_ref(x, w1, b1, w2, b2):
    return jnp.maximum(x @ w1 + b1, 0.0) @ w2 + b2


def processor_ref(node_feats, edge_sets, params):
    for bp in params:
        updated, res_edges = [], []
        for (ef, s, r), p in zip(edge_sets, bp["edge_mlps"]):
            cat = jnp.concatenate([node_feats[s], node_feats[r], ef], axis=-1)
            upd = _mlp_ref(cat, *p)
            updated.append(upd)
            res_edges.append(upd + ef)
        _, _, r0 = edge_sets[0]
        agg = jax.ops.segment_sum(updated[0], r0, num_segments=node_feats.shape[0])
        node_feats = _mlp_ref(jnp.concatenate([node_feats, agg], axis=-1),
                              *bp["node_mlp"]) + node_feats
        edge_sets = [(res, s, r) for res, (_, s, r) in zip(res_edges, edge_sets)]
    return node_feats, edge_sets


# --------------------------- main ---------------------------

if __name__ == "__main__":
    key = jax.random.PRNGKey(0)

    def run_case(N, E, steps, seed_offset):
        k = jax.random.fold_in(key, seed_offset)
        k_node, k_edge, k_s, k_r, k_par = jax.random.split(k, 5)
        node_feats = jax.random.normal(k_node, (N, LATENT), jnp.float32)
        edge_feats = jax.random.normal(k_edge, (E, LATENT), jnp.float32)
        senders = jax.random.randint(k_s, (E,), 0, N, jnp.int32)
        receivers = jax.random.randint(k_r, (E,), 0, N, jnp.int32)

        params = init_params(k_par, steps)
        stacked = stack_params(params)           # split / pad / concat / stack once
        edge_sets = [(edge_feats, senders, receivers)]

        fwd = jax.jit(lambda nf, es: processor(nf, es, stacked))
        out_nodes, out_edge_sets = fwd(node_feats, edge_sets)
        out_nodes = jax.block_until_ready(out_nodes)
        out_edges = jax.block_until_ready(out_edge_sets[0][0])

        ref_nodes, ref_edge_sets = processor_ref(node_feats, edge_sets, params)
        assert jnp.allclose(out_nodes, ref_nodes, atol=1e-4, rtol=1e-4)
        assert jnp.allclose(out_edges, ref_edge_sets[0][0], atol=1e-4, rtol=1e-4)

    # single edge tile (grid over steps only)
    run_case(N=16, E=32, steps=2, seed_offset=0)
    # multi-tile accumulation path: E > 2*TILE_E and not a multiple of TILE_E,
    # N not a multiple of 8 (exercises padded nodes/edges + out-of-range receivers)
    run_case(N=37, E=1300, steps=2, seed_offset=1)

    print("KERNEL_OK")
</pallas_src>

<mosaic_0001>
module attributes {stable_mosaic.version = 11 : i64} {
  func.func @_fused_proc_kernel(%arg0: i32, %arg1: memref<32x1xi32, #tpu.memory_space<vmem>>, %arg2: memref<32x1xi32, #tpu.memory_space<vmem>>, %arg3: memref<1x32xi32, #tpu.memory_space<vmem>>, %arg4: memref<16x128xf32, #tpu.memory_space<vmem>>, %arg5: memref<32x128xf32, #tpu.memory_space<vmem>>, %arg6: memref<1x128x128xf32, #tpu.memory_space<vmem>>, %arg7: memref<1x128x128xf32, #tpu.memory_space<vmem>>, %arg8: memref<1x128x128xf32, #tpu.memory_space<vmem>>, %arg9: memref<1x1x128xf32, #tpu.memory_space<vmem>>, %arg10: memref<1x128x128xf32, #tpu.memory_space<vmem>>, %arg11: memref<1x1x128xf32, #tpu.memory_space<vmem>>, %arg12: memref<1x256x128xf32, #tpu.memory_space<vmem>>, %arg13: memref<1x1x128xf32, #tpu.memory_space<vmem>>, %arg14: memref<1x128x128xf32, #tpu.memory_space<vmem>>, %arg15: memref<1x1x128xf32, #tpu.memory_space<vmem>>, %arg16: memref<16x128xf32, #tpu.memory_space<vmem>>, %arg17: memref<32x128xf32, #tpu.memory_space<vmem>>, %arg18: memref<16x256xf32, #tpu.memory_space<vmem>>) attributes {dimension_semantics = [#tpu.dimension_semantics<arbitrary>], iteration_bounds = array<i64: 2>, scalar_prefetch = 0 : i64, scratch_operands = 1 : i64, tpu.core_type = #tpu.core_type<tc>, window_params = [{pipeline_mode = #tpu.pipeline_mode<synchronous>, transform_indices = @transform_0, window_bounds = array<i64: 32, 1>}, {pipeline_mode = #tpu.pipeline_mode<synchronous>, transform_indices = @transform_1, window_bounds = array<i64: 32, 1>}, {pipeline_mode = #tpu.pipeline_mode<synchronous>, transform_indices = @transform_2, window_bounds = array<i64: 1, 32>}, {pipeline_mode = #tpu.pipeline_mode<synchronous>, transform_indices = @transform_3, window_bounds = array<i64: 16, 128>}, {pipeline_mode = #tpu.pipeline_mode<synchronous>, transform_indices = @transform_4, window_bounds = array<i64: 32, 128>}, {transform_indices = @transform_5, window_bounds = array<i64: 1, 128, 128>}, {transform_indices = @transform_6, window_bounds = array<i64: 1, 128, 128>}, {transform_indices = @transform_7, window_bounds = array<i64: 1, 128, 128>}, {transform_indices = @transform_8, window_bounds = array<i64: 1, 1, 128>}, {transform_indices = @transform_9, window_bounds = array<i64: 1, 128, 128>}, {transform_indices = @transform_10, window_bounds = array<i64: 1, 1, 128>}, {transform_indices = @transform_11, window_bounds = array<i64: 1, 256, 128>}, {transform_indices = @transform_12, window_bounds = array<i64: 1, 1, 128>}, {transform_indices = @transform_13, window_bounds = array<i64: 1, 128, 128>}, {transform_indices = @transform_14, window_bounds = array<i64: 1, 1, 128>}, {pipeline_mode = #tpu.pipeline_mode<synchronous>, transform_indices = @transform_15, window_bounds = array<i64: 16, 128>}, {pipeline_mode = #tpu.pipeline_mode<synchronous>, transform_indices = @transform_16, window_bounds = array<i64: 32, 128>}]} {
    %c0_i32 = arith.constant 0 : i32
    %0 = arith.cmpi eq, %arg0, %c0_i32 : i32
    %1 = arith.extui %0 : i1 to i32
    %c0_i32_0 = arith.constant 0 : i32
    %2 = arith.cmpi ne, %1, %c0_i32_0 : i32
    scf.if %2 {
      %c0_63 = arith.constant 0 : index
      %c0_64 = arith.constant 0 : index
      %92 = vector.load %arg4[%c0_63, %c0_64] : memref<16x128xf32, #tpu.memory_space<vmem>>, vector<16x128xf32>
      %c0_65 = arith.constant 0 : index
      %c0_66 = arith.constant 0 : index
      %93 = vector.load %arg16[%c0_65, %c0_66] : memref<16x128xf32, #tpu.memory_space<vmem>>, vector<16x128xf32>
      tpu.vector_store %arg16[%c0_65, %c0_66], %92 {strides = array<i32>} : memref<16x128xf32, #tpu.memory_space<vmem>>, vector<16x128xf32>,
      %c0_67 = arith.constant 0 : index
      %c0_68 = arith.constant 0 : index
      %94 = vector.load %arg5[%c0_67, %c0_68] : memref<32x128xf32, #tpu.memory_space<vmem>>, vector<32x128xf32>
      %c0_69 = arith.constant 0 : index
      %c0_70 = arith.constant 0 : index
      %95 = vector.load %arg17[%c0_69, %c0_70] : memref<32x128xf32, #tpu.memory_space<vmem>>, vector<32x128xf32>
      tpu.vector_store %arg17[%c0_69, %c0_70], %94 {strides = array<i32>} : memref<32x128xf32, #tpu.memory_space<vmem>>, vector<32x128xf32>,
    } else {
    }
    %c0 = arith.constant 0 : index
    %c0_1 = arith.constant 0 : index
    %3 = vector.load %arg16[%c0, %c0_1] : memref<16x128xf32, #tpu.memory_space<vmem>>, vector<16x128xf32>
    %c0_2 = arith.constant 0 : index
    %c0_3 = arith.constant 0 : index
    %c0_4 = arith.constant 0 : index
    %4 = vector.load %arg6[%c0_2, %c0_3, %c0_4] : memref<1x128x128xf32, #tpu.memory_space<vmem>>, vector<1x128x128xf32>
    %5 = vector.shape_cast %4 : vector<1x128x128xf32> to vector<128x128xf32>
    %cst = arith.constant dense<0.000000e+00> : vector<16x128xf32>
    %6 = tpu.matmul %3, %5, %cst {dimension_numbers = #tpu.dot_dimension_numbers<[1], [0], [0], [1], [0, 0, 1, 1], [], []>} : vector<16x128xf32>, vector<128x128xf32>, vector<16x128xf32> -> vector<16x128xf32>
    %c0_5 = arith.constant 0 : index
    %c0_6 = arith.constant 0 : index
    %c0_7 = arith.constant 0 : index
    %7 = vector.load %arg7[%c0_5, %c0_6, %c0_7] : memref<1x128x128xf32, #tpu.memory_space<vmem>>, vector<1x128x128xf32>
    %8 = vector.shape_cast %7 : vector<1x128x128xf32> to vector<128x128xf32>
    %cst_8 = arith.constant dense<0.000000e+00> : vector<16x128xf32>
    %9 = tpu.matmul %3, %8, %cst_8 {dimension_numbers = #tpu.dot_dimension_numbers<[1], [0], [0], [1], [0, 0, 1, 1], [], []>} : vector<16x128xf32>, vector<128x128xf32>, vector<16x128xf32> -> vector<16x128xf32>
    %c0_9 = arith.constant 0 : index
    %c0_10 = arith.constant 0 : index
    %c0_11 = arith.constant 0 : index
    %10 = vector.load %arg8[%c0_9, %c0_10, %c0_11] : memref<1x128x128xf32, #tpu.memory_space<vmem>>, vector<1x128x128xf32>
    %11 = vector.shape_cast %10 : vector<1x128x128xf32> to vector<128x128xf32>
    %c0_12 = arith.constant 0 : index
    %c0_13 = arith.constant 0 : index
    %c0_14 = arith.constant 0 : index
    %12 = vector.load %arg9[%c0_12, %c0_13, %c0_14] : memref<1x1x128xf32, #tpu.memory_space<vmem>>, vector<1x1x128xf32>
    %13 = vector.shape_cast %12 : vector<1x1x128xf32> to vector<1x128xf32>
    %c0_15 = arith.constant 0 : index
    %c0_16 = arith.constant 0 : index
    %c0_17 = arith.constant 0 : index
    %14 = vector.load %arg10[%c0_15, %c0_16, %c0_17] : memref<1x128x128xf32, #tpu.memory_space<vmem>>, vector<1x128x128xf32>
    %15 = vector.shape_cast %14 : vector<1x128x128xf32> to vector<128x128xf32>
    %c0_18 = arith.constant 0 : index
    %c0_19 = arith.constant 0 : index
    %c0_20 = arith.constant 0 : index
    %16 = vector.load %arg11[%c0_18, %c0_19, %c0_20] : memref<1x1x128xf32, #tpu.memory_space<vmem>>, vector<1x1x128xf32>
    %17 = vector.shape_cast %16 : vector<1x1x128xf32> to vector<1x128xf32>
    %c0_21 = arith.constant 0 : index
    %c0_22 = arith.constant 0 : index
    %18 = vector.load %arg18[%c0_21, %c0_22] : memref<16x256xf32, #tpu.memory_space<vmem>>, vector<16x128xf32>
    tpu.vector_store %arg18[%c0_21, %c0_22], %3 {strides = array<i32>} : memref<16x256xf32, #tpu.memory_space<vmem>>, vector<16x128xf32>,
    %cst_23 = arith.constant 0.000000e+00 : f32
    %19 = vector.broadcast %cst_23 : f32 to vector<16x128xf32>
    %c0_24 = arith.constant 0 : index
    %c128 = arith.constant 128 : index
    %20 = vector.load %arg18[%c0_24, %c128] : memref<16x256xf32, #tpu.memory_space<vmem>>, vector<16x128xf32>
    tpu.vector_store %arg18[%c0_24, %c128], %19 {strides = array<i32>} : memref<16x256xf32, #tpu.memory_space<vmem>>, vector<16x128xf32>,
    %c0_i32_25 = arith.constant 0 : i32
    %c1_i32 = arith.constant 1 : i32
    %21 = arith.muli %c0_i32_25, %c1_i32 : i32
    %c0_i32_26 = arith.constant 0 : i32
    %22 = arith.addi %c0_i32_26, %21 : i32
    %c32_i32 = arith.constant 32 : i32
    %23 = arith.muli %22, %c32_i32 : i32
    %24 = tpu.assume_multiple %23, 32 : i32
    %25 = arith.index_cast %24 : i32 to index
    %c0_27 = arith.constant 0 : index
    %26 = vector.load %arg1[%25, %c0_27] : memref<32x1xi32, #tpu.memory_space<vmem>>, vector<32x1xi32>
    %27 = arith.index_cast %24 : i32 to index
    %c0_28 = arith.constant 0 : index
    %28 = vector.load %arg2[%27, %c0_28] : memref<32x1xi32, #tpu.memory_space<vmem>>, vector<32x1xi32>
    %29 = arith.index_cast %24 : i32 to index
    %c0_29 = arith.constant 0 : index
    %30 = vector.load %arg17[%29, %c0_29] : memref<32x128xf32, #tpu.memory_space<vmem>>, vector<32x128xf32>
    %31 = tpu.iota {dimensions = array<i32: 1>} : vector<32x16xi32>
    %32 = vector.broadcast %26 : vector<32x1xi32> to vector<32x16xi32>
    %33 = arith.cmpi eq, %32, %31 : vector<32x16xi32>
    %34 = arith.extui %33 : vector<32x16xi1> to vector<32x16xi32>
    %35 = arith.sitofp %34 : vector<32x16xi32> to vector<32x16xf32>
    %36 = vector.broadcast %28 : vector<32x1xi32> to vector<32x16xi32>
    %37 = arith.cmpi eq, %36, %31 : vector<32x16xi32>
    %38 = arith.extui %37 : vector<32x16xi1> to vector<32x16xi32>
    %39 = arith.sitofp %38 : vector<32x16xi32> to vector<32x16xf32>
    %cst_30 = arith.constant dense<0.000000e+00> : vector<32x128xf32>
    %40 = tpu.matmul %35, %6, %cst_30 {dimension_numbers = #tpu.dot_dimension_numbers<[1], [0], [0], [1], [0, 0, 1, 1], [], []>} : vector<32x16xf32>, vector<16x128xf32>, vector<32x128xf32> -> vector<32x128xf32>
    %cst_31 = arith.constant dense<0.000000e+00> : vector<32x128xf32>
    %41 = tpu.matmul %39, %9, %cst_31 {dimension_numbers = #tpu.dot_dimension_numbers<[1], [0], [0], [1], [0, 0, 1, 1], [], []>} : vector<32x16xf32>, vector<16x128xf32>, vector<32x128xf32> -> vector<32x128xf32>
    %42 = arith.addf %40, %41 : vector<32x128xf32>
    %cst_32 = arith.constant dense<0.000000e+00> : vector<32x128xf32>
    %43 = tpu.matmul %30, %11, %cst_32 {dimension_numbers = #tpu.dot_dimension_numbers<[1], [0], [0], [1], [0, 0, 1, 1], [], []>} : vector<32x128xf32>, vector<128x128xf32>, vector<32x128xf32> -> vector<32x128xf32>
    %44 = arith.addf %42, %43 : vector<32x128xf32>
    %45 = vector.broadcast %13 : vector<1x128xf32> to vector<32x128xf32>
    %46 = arith.addf %44, %45 : vector<32x128xf32>
    %cst_33 = arith.constant 0.000000e+00 : f32
    %47 = vector.broadcast %cst_33 : f32 to vector<32x128xf32>
    %48 = arith.maximumf %46, %47 : vector<32x128xf32>
    %cst_34 = arith.constant dense<0.000000e+00> : vector<32x128xf32>
    %49 = tpu.matmul %48, %15, %cst_34 {dimension_numbers = #tpu.dot_dimension_numbers<[1], [0], [0], [1], [0, 0, 1, 1], [], []>} : vector<32x128xf32>, vector<128x128xf32>, vector<32x128xf32> -> vector<32x128xf32>
    %50 = vector.broadcast %17 : vector<1x128xf32> to vector<32x128xf32>
    %51 = arith.addf %49, %50 : vector<32x128xf32>
    %52 = arith.addf %51, %30 : vector<32x128xf32>
    %53 = arith.index_cast %24 : i32 to index
    %c0_35 = arith.constant 0 : index
    %54 = vector.load %arg17[%53, %c0_35] : memref<32x128xf32, #tpu.memory_space<vmem>>, vector<32x128xf32>
    tpu.vector_store %arg17[%53, %c0_35], %52 {strides = array<i32>} : memref<32x128xf32, #tpu.memory_space<vmem>>, vector<32x128xf32>,
    %55 = arith.index_cast %22 : i32 to index
    %c0_36 = arith.constant 0 : index
    %56 = vector.load %arg3[%55, %c0_36] : memref<1x32xi32, #tpu.memory_space<vmem>>, vector<1x32xi32>
    %57 = tpu.iota {dimensions = array<i32: 0>} : vector<16x32xi32>
    %58 = vector.broadcast %56 : vector<1x32xi32> to vector<16x32xi32>
    %59 = arith.cmpi eq, %57, %58 : vector<16x32xi32>
    %60 = arith.extui %59 : vector<16x32xi1> to vector<16x32xi32>
    %61 = arith.sitofp %60 : vector<16x32xi32> to vector<16x32xf32>
    %c0_37 = arith.constant 0 : index
    %c128_38 = arith.constant 128 : index
    %62 = vector.load %arg18[%c0_37, %c128_38] : memref<16x256xf32, #tpu.memory_space<vmem>>, vector<16x128xf32>
    %cst_39 = arith.constant dense<0.000000e+00> : vector<16x128xf32>
    %63 = tpu.matmul %61, %51, %cst_39 {dimension_numbers = #tpu.dot_dimension_numbers<[1], [0], [0], [1], [0, 0, 1, 1], [], []>} : vector<16x32xf32>, vector<32x128xf32>, vector<16x128xf32> -> vector<16x128xf32>
    %64 = arith.addf %62, %63 : vector<16x128xf32>
    %c0_40 = arith.constant 0 : index
    %c128_41 = arith.constant 128 : index
    %65 = vector.load %arg18[%c0_40, %c128_41] : memref<16x256xf32, #tpu.memory_space<vmem>>, vector<16x128xf32>
    tpu.vector_store %arg18[%c0_40, %c128_41], %64 {strides = array<i32>} : memref<16x256xf32, #tpu.memory_space<vmem>>, vector<16x128xf32>,
    %c1_i32_42 = arith.constant 1 : i32
    %c0_43 = arith.constant 0 : index
    %c0_44 = arith.constant 0 : index
    %66 = vector.load %arg18[%c0_43, %c0_44] : memref<16x256xf32, #tpu.memory_space<vmem>>, vector<16x256xf32>
    %c0_45 = arith.constant 0 : index
    %c0_46 = arith.constant 0 : index
    %c0_47 = arith.constant 0 : index
    %67 = vector.load %arg12[%c0_45, %c0_46, %c0_47] : memref<1x256x128xf32, #tpu.memory_space<vmem>>, vector<1x256x128xf32>
    %68 = vector.shape_cast %67 : vector<1x256x128xf32> to vector<256x128xf32>
    %cst_48 = arith.constant dense<0.000000e+00> : vector<16x128xf32>
    %69 = tpu.matmul %66, %68, %cst_48 {dimension_numbers = #tpu.dot_dimension_numbers<[1], [0], [0], [1], [0, 0, 1, 1], [], []>} : vector<16x256xf32>, vector<256x128xf32>, vector<16x128xf32> -> vector<16x128xf32>
    %c0_49 = arith.constant 0 : index
    %c0_50 = arith.constant 0 : index
    %c0_51 = arith.constant 0 : index
    %70 = vector.load %arg13[%c0_49, %c0_50, %c0_51] : memref<1x1x128xf32, #tpu.memory_space<vmem>>, vector<1x1x128xf32>
    %71 = vector.shape_cast %70 : vector<1x1x128xf32> to vector<1x128xf32>
    %72 = vector.broadcast %71 : vector<1x128xf32> to vector<16x128xf32>
    %73 = arith.addf %69, %72 : vector<16x128xf32>
    %cst_52 = arith.constant 0.000000e+00 : f32
    %74 = vector.broadcast %cst_52 : f32 to vector<16x128xf32>
    %75 = arith.maximumf %73, %74 : vector<16x128xf32>
    %c0_53 = arith.constant 0 : index
    %c0_54 = arith.constant 0 : index
    %c0_55 = arith.constant 0 : index
    %76 = vector.load %arg14[%c0_53, %c0_54, %c0_55] : memref<1x128x128xf32, #tpu.memory_space<vmem>>, vector<1x128x128xf32>
    %77 = vector.shape_cast %76 : vector<1x128x128xf32> to vector<128x128xf32>
    %cst_56 = arith.constant dense<0.000000e+00> : vector<16x128xf32>
    %78 = tpu.matmul %75, %77, %cst_56 {dimension_numbers = #tpu.dot_dimension_numbers<[1], [0], [0], [1], [0, 0, 1, 1], [], []>} : vector<16x128xf32>, vector<128x128xf32>, vector<16x128xf32> -> vector<16x128xf32>
    %c0_57 = arith.constant 0 : index
    %c0_58 = arith.constant 0 : index
    %c0_59 = arith.constant 0 : index
    %79 = vector.load %arg15[%c0_57, %c0_58, %c0_59] : memref<1x1x128xf32, #tpu.memory_space<vmem>>, vector<1x1x128xf32>
    %80 = vector.shape_cast %79 : vector<1x1x128xf32> to vector<1x128xf32>
    %81 = vector.broadcast %80 : vector<1x128xf32> to vector<16x128xf32>
    %82 = arith.addf %78, %81 : vector<16x128xf32>
    %83 = arith.addf %82, %3 : vector<16x128xf32>
    %84 = tpu.iota {dimensions = array<i32: 0>} : vector<16x1xi32>
    %c16_i32 = arith.constant 16 : i32
    %85 = vector.broadcast %c16_i32 : i32 to vector<16x1xi32>
    %86 = arith.cmpi slt, %84, %85 : vector<16x1xi32>
    %cst_60 = arith.constant 0.000000e+00 : f32
    %87 = vector.shape_cast %86 : vector<16x1xi1> to vector<16x1xi1>
    %88 = vector.broadcast %87 : vector<16x1xi1> to vector<16x128xi1>
    %89 = vector.broadcast %cst_60 : f32 to vector<16x128xf32>
    %90 = arith.select %88, %83, %89 : vector<16x128xi1>, vector<16x128xf32>
    %c0_61 = arith.constant 0 : index
    %c0_62 = arith.constant 0 : index
    %91 = vector.load %arg16[%c0_61, %c0_62] : memref<16x128xf32, #tpu.memory_space<vmem>>, vector<16x128xf32>
    tpu.vector_store %arg16[%c0_61, %c0_62], %90 {strides = array<i32>} : memref<16x128xf32, #tpu.memory_space<vmem>>, vector<16x128xf32>,
    return
  }
  func.func @transform_0(%arg0: i32) -> (i32, i32) {
    %c0_i32 = arith.constant 0 : i32
    %c0_i32_0 = arith.constant 0 : i32
    %c0_i32_1 = arith.constant 0 : i32
    return %c0_i32, %c0_i32_0 : i32, i32
  }
  func.func @transform_1(%arg0: i32) -> (i32, i32) {
    %c0_i32 = arith.constant 0 : i32
    %c0_i32_0 = arith.constant 0 : i32
    %c0_i32_1 = arith.constant 0 : i32
    return %c0_i32, %c0_i32_0 : i32, i32
  }
  func.func @transform_2(%arg0: i32) -> (i32, i32) {
    %c0_i32 = arith.constant 0 : i32
    %c0_i32_0 = arith.constant 0 : i32
    %c0_i32_1 = arith.constant 0 : i32
    return %c0_i32, %c0_i32_0 : i32, i32
  }
  func.func @transform_3(%arg0: i32) -> (i32, i32) {
    %c0_i32 = arith.constant 0 : i32
    %c0_i32_0 = arith.constant 0 : i32
    %c0_i32_1 = arith.constant 0 : i32
    return %c0_i32, %c0_i32_0 : i32, i32
  }
  func.func @transform_4(%arg0: i32) -> (i32, i32) {
    %c0_i32 = arith.constant 0 : i32
    %c0_i32_0 = arith.constant 0 : i32
    %c0_i32_1 = arith.constant 0 : i32
    return %c0_i32, %c0_i32_0 : i32, i32
  }
  func.func @transform_5(%arg0: i32) -> (i32, i32, i32) {
    %c0_i32 = arith.constant 0 : i32
    %c0_i32_0 = arith.constant 0 : i32
    %c0_i32_1 = arith.constant 0 : i32
    return %arg0, %c0_i32, %c0_i32_0 : i32, i32, i32
  }
  func.func @transform_6(%arg0: i32) -> (i32, i32, i32) {
    %c0_i32 = arith.constant 0 : i32
    %c0_i32_0 = arith.constant 0 : i32
    %c0_i32_1 = arith.constant 0 : i32
    return %arg0, %c0_i32, %c0_i32_0 : i32, i32, i32
  }
  func.func @transform_7(%arg0: i32) -> (i32, i32, i32) {
    %c0_i32 = arith.constant 0 : i32
    %c0_i32_0 = arith.constant 0 : i32
    %c0_i32_1 = arith.constant 0 : i32
    return %arg0, %c0_i32, %c0_i32_0 : i32, i32, i32
  }
  func.func @transform_8(%arg0: i32) -> (i32, i32, i32) {
    %c0_i32 = arith.constant 0 : i32
    %c0_i32_0 = arith.constant 0 : i32
    %c0_i32_1 = arith.constant 0 : i32
    return %arg0, %c0_i32, %c0_i32_0 : i32, i32, i32
  }
  func.func @transform_9(%arg0: i32) -> (i32, i32, i32) {
    %c0_i32 = arith.constant 0 : i32
    %c0_i32_0 = arith.constant 0 : i32
    %c0_i32_1 = arith.constant 0 : i32
    return %arg0, %c0_i32, %c0_i32_0 : i32, i32, i32
  }
  func.func @transform_10(%arg0: i32) -> (i32, i32, i32) {
    %c0_i32 = arith.constant 0 : i32
    %c0_i32_0 = arith.constant 0 : i32
    %c0_i32_1 = arith.constant 0 : i32
    return %arg0, %c0_i32, %c0_i32_0 : i32, i32, i32
  }
  func.func @transform_11(%arg0: i32) -> (i32, i32, i32) {
    %c0_i32 = arith.constant 0 : i32
    %c0_i32_0 = arith.constant 0 : i32
    %c0_i32_1 = arith.constant 0 : i32
    return %arg0, %c0_i32, %c0_i32_0 : i32, i32, i32
  }
  func.func @transform_12(%arg0: i32) -> (i32, i32, i32) {
    %c0_i32 = arith.constant 0 : i32
    %c0_i32_0 = arith.constant 0 : i32
    %c0_i32_1 = arith.constant 0 : i32
    return %arg0, %c0_i32, %c0_i32_0 : i32, i32, i32
  }
  func.func @transform_13(%arg0: i32) -> (i32, i32, i32) {
    %c0_i32 = arith.constant 0 : i32
    %c0_i32_0 = arith.constant 0 : i32
    %c0_i32_1 = arith.constant 0 : i32
    return %arg0, %c0_i32, %c0_i32_0 : i32, i32, i32
  }
  func.func @transform_14(%arg0: i32) -> (i32, i32, i32) {
    %c0_i32 = arith.constant 0 : i32
    %c0_i32_0 = arith.constant 0 : i32
    %c0_i32_1 = arith.constant 0 : i32
    return %arg0, %c0_i32, %c0_i32_0 : i32, i32, i32
  }
  func.func @transform_15(%arg0: i32) -> (i32, i32) {
    %c0_i32 = arith.constant 0 : i32
    %c0_i32_0 = arith.constant 0 : i32
    %c0_i32_1 = arith.constant 0 : i32
    return %c0_i32, %c0_i32_0 : i32, i32
  }
  func.func @transform_16(%arg0: i32) -> (i32, i32) {
    %c0_i32 = arith.constant 0 : i32
    %c0_i32_0 = arith.constant 0 : i32
    %c0_i32_1 = arith.constant 0 : i32
    return %c0_i32, %c0_i32_0 : i32, i32
  }
}

</mosaic_0001>

<llo_original>
// kernel: _lambda_.1
$region0: #{_lambda_.1}
  #allocation0 [shape = 'u32[]', space=smem, size = 0x4, offset = 0x4, fixed_abs, tag = 'smem constant byte address 0x4 - core index']
  #allocation1 [shape = 'u32[144,128]{1,0:T(1,128)}', space=vmem, size = 0x12000, scoped, tag = 'internal scratch']
  #allocation2 [shape = 'f32[16,256]{1,0:T(8,128)}', space=vmem, size = 0x4000, scoped, tag = 'scratch operand']
  %s0 = inlined_call_operand.vmem [shape: s32[32,1], index: 0, kind: input, shape index: {}]
  %s1 = inlined_call_operand.vmem [shape: s32[32,1], index: 1, kind: input, shape index: {}]
  %s2 = inlined_call_operand.vmem [shape: s32[1,32], index: 2, kind: input, shape index: {}]
  %s3 = inlined_call_operand.vmem [shape: f32[16,128], index: 3, kind: input, shape index: {}]
  %s4 = inlined_call_operand.vmem [shape: f32[32,128], index: 4, kind: input, shape index: {}]
  %s5 = inlined_call_operand.hbm [shape: f32[2,128,128], index: 5, kind: input, shape index: {}]
  %s6 = inlined_call_operand.hbm [shape: f32[2,128,128], index: 6, kind: input, shape index: {}]
  %s7 = inlined_call_operand.hbm [shape: f32[2,128,128], index: 7, kind: input, shape index: {}]
  %s8 = inlined_call_operand.vmem [shape: f32[2,1,128], index: 8, kind: input, shape index: {}, may-alias: {8,10,12,14}]
  %s9 = inlined_call_operand.hbm [shape: f32[2,128,128], index: 9, kind: input, shape index: {}]
  %s10 = inlined_call_operand.vmem [shape: f32[2,1,128], index: 10, kind: input, shape index: {}, may-alias: {8,10,12,14}]
  %s11 = inlined_call_operand.hbm [shape: f32[2,256,128], index: 11, kind: input, shape index: {}]
  %s12 = inlined_call_operand.vmem [shape: f32[2,1,128], index: 12, kind: input, shape index: {}, may-alias: {8,10,12,14}]
  %s13 = inlined_call_operand.hbm [shape: f32[2,128,128], index: 13, kind: input, shape index: {}]
  %s14 = inlined_call_operand.vmem [shape: f32[2,1,128], index: 14, kind: input, shape index: {}, may-alias: {8,10,12,14}]
  %s15 = inlined_call_operand.hbm [shape: f32[16,128], index: 15, kind: output, shape index: {0}]
  %s16 = inlined_call_operand.hbm [shape: f32[32,128], index: 16, kind: output, shape index: {1}]
  %17 = xla_tuple %s15, %s16
  %s18 = sld [smem:[#allocation0]]
  $region129: #{_lambda_.1} parent=0
    _
  %s20 = ssub.s32 1, %s18
  %s21 = scalar_select 0, %s20, %s18
  $region1: #{_lambda_.1} parent=0
    #allocation3 [shape = 'u8[131072]{0}', space=vmem, size = 0x20000, scoped, tag = 'input window, operand 5']
    #allocation4 [shape = 's32[2]{0}', space=sflag, size = 0x8, scoped, tag = 'scoped memory for _lambda_.1']
    #allocation5 [shape = 's32[2]{0}', space=sflag, size = 0x8, scoped, tag = 'scoped memory for _lambda_.1']
    #allocation6 [shape = 'u8[131072]{0}', space=vmem, size = 0x20000, scoped, tag = 'input window, operand 6']
    #allocation7 [shape = 's32[2]{0}', space=sflag, size = 0x8, scoped, tag = 'scoped memory for _lambda_.1']
    #allocation8 [shape = 'u8[131072]{0}', space=vmem, size = 0x20000, scoped, tag = 'input window, operand 7']
    #allocation9 [shape = 'u8[131072]{0}', space=vmem, size = 0x20000, scoped, tag = 'input window, operand 9']
    #allocation10 [shape = 's32[2]{0}', space=sflag, size = 0x8, scoped, tag = 'scoped memory for _lambda_.1']
    #allocation11 [shape = 'u8[262144]{0}', space=vmem, size = 0x40000, scoped, tag = 'input window, operand 11']
    #allocation12 [shape = 'u8[131072]{0}', space=vmem, size = 0x20000, scoped, tag = 'input window, operand 13']
    #allocation13 [shape = 's32[2]{0}', space=sflag, size = 0x8, scoped, tag = 'scoped memory for _lambda_.1']
    #allocation14 [shape = 'u8[8192]{0}', space=vmem, size = 0x2000, scoped, tag = 'output window, operand 0, single buffered']
    #allocation15 [shape = 'u8[16384]{0}', space=vmem, size = 0x4000, scoped, tag = 'output window, operand 1, single buffered']
    #allocation16 [shape = 's32[1]{0}', space=sflag, size = 0x4, scoped, tag = 'scoped memory for _lambda_.1']
    %22 = vsyncpa [#allocation4], 0
    %s23 = scalar_lea.sflag [#allocation4], 1
    %24 = vsyncpa %s23, 0
    %25 = vsyncpa [#allocation7], 0
    %s26 = scalar_lea.sflag [#allocation7], 1
    %27 = vsyncpa %s26, 0
    %28 = vsyncpa [#allocation10], 0
    %s29 = scalar_lea.sflag [#allocation10], 1
    %30 = vsyncpa %s29, 0
    %31 = vsyncpa [#allocation13], 0
    %s32 = scalar_lea.sflag [#allocation13], 1
    %33 = vsyncpa %s32, 0
    %34 = vsyncpa [#allocation5], 0
    %35 = vsyncpa [#allocation16], 0
    loop: start=0, step=1, limit=4
    $region2: #{_lambda_.1} parent=1 // loop_pre_header
      _
    $region3: #{_lambda_.1} parent=1 // loop_header
      %s37 = sphi 0, %s41
      %p38 = scmp.ge.s32.totalorder %s37, 4
      %s45 = sphi 0, %s45
      %s47 = sphi 0, %s45
      %s48 = sphi 0, %s47
      %s62 = sphi 0, %s48
      %s66 = sphi 0, %s66
      %s68 = sphi 0, %s66
      %s69 = sphi 0, %s68
      %s83 = sphi 0, %s69
      %s87 = sphi 0, %s87
      %s89 = sphi 0, %s87
      %s90 = sphi 0, %s89
      %s104 = sphi 0, %s90
      %s108 = sphi 0, %s108
      %s110 = sphi 0, %s108
      %s111 = sphi 0, %s110
      %s125 = sphi 0, %s111
      %s129 = sphi 0, %s129
      %s131 = sphi 0, %s129
      %s132 = sphi 0, %s131
      %s146 = sphi 0, %s132
      %s152 = sphi 0, %s154
      %s155 = sphi 0, %s152
      %s156 = sphi 0, %s155
      %s172 = sphi 0, %s156
      %s178 = sphi 0, %s180
      %s181 = sphi 0, %s178
      %s182 = sphi 0, %s181
      %s198 = sphi 0, %s182
      %s204 = sphi 0, %s206
      %s207 = sphi 0, %s204
      %s208 = sphi 0, %s207
      %s224 = sphi 0, %s208
      %s230 = sphi 0, %s232
      %s233 = sphi 0, %s230
      %s234 = sphi 0, %s233
      %s250 = sphi 0, %s234
      %s256 = sphi 0, %s258
      %s259 = sphi 0, %s256
      %s260 = sphi 0, %s259
      %s276 = sphi 0, %s260
      %s282 = sphi 0, %s284
      %s285 = sphi 0, %s282
      %s286 = sphi 0, %s285
      %s302 = sphi 0, %s286
      %s308 = sphi 0, %s310
      %s311 = sphi 0, %s308
      %s312 = sphi 0, %s311
      %s328 = sphi 0, %s312
      %s334 = sphi 0, %s336
      %s337 = sphi 0, %s334
      %s338 = sphi 0, %s337
      %s354 = sphi 0, %s338
      %s360 = sphi 0, %s362
      %s363 = sphi 0, %s360
      %s364 = sphi 0, %s363
      %s380 = sphi 0, %s364
      %s386 = sphi 0, %s388
      %s389 = sphi 0, %s386
      %s390 = sphi 0, %s389
      %s406 = sphi 0, %s390
      %s410 = sphi 0, %s410
      %s412 = sphi 0, %s410
      %s413 = sphi 0, %s412
      %s427 = sphi 0, %s413
      %s431 = sphi 0, %s431
      %s433 = sphi 0, %s431
      %s434 = sphi 0, %s433
      %s448 = sphi 0, %s434
    $region4: #{_lambda_.1} parent=1 // loop_header_branch
      %40 = sbr.rel (%p38) target = $region8
    $region5: #{_lambda_.1} parent=1 // loop_body
      %s42 = ssub.s32 %s37, 1
      %s43 = ssub.s32 %s37, 2
      %s44 = sadd.s32 %s37, 1
      %s46 = sadd.s32 %s45, 1
      %p49 = scmp.eq.s32.totalorder %s37, 1
      %p50 = scmp.ne.s32.totalorder %s45, %s47
      %p51 = scmp.eq.s32.totalorder %s37, 0
      %p52 = por %p50, %p51
      %p53 = scmp.ne.s32.totalorder %s45, %s47
      %p54 = scmp.eq.s32.totalorder %s42, 1
      %p55 = por %p53, %p54
      %p56 = scmp.ne.s32.totalorder %s47, %s48
      %p57 = scmp.eq.s32.totalorder %s42, 0
      %p58 = por %p56, %p57
      %p59 = scmp.ne.s32.totalorder %s47, %s48
      %p60 = scmp.eq.s32.totalorder %s43, 1
      %p61 = por %p59, %p60
      %p63 = scmp.ne.s32.totalorder %s48, %s62
      %p64 = scmp.eq.s32.totalorder %s43, 0
      %p65 = por %p63, %p64
      %s67 = sadd.s32 %s66, 1
      %p70 = scmp.eq.s32.totalorder %s37, 1
      %p71 = scmp.ne.s32.totalorder %s66, %s68
      %p72 = scmp.eq.s32.totalorder %s37, 0
      %p73 = por %p71, %p72
      %p74 = scmp.ne.s32.totalorder %s66, %s68
      %p75 = scmp.eq.s32.totalorder %s42, 1
      %p76 = por %p74, %p75
      %p77 = scmp.ne.s32.totalorder %s68, %s69
      %p78 = scmp.eq.s32.totalorder %s42, 0
      %p79 = por %p77, %p78
      %p80 = scmp.ne.s32.totalorder %s68, %s69
      %p81 = scmp.eq.s32.totalorder %s43, 1
      %p82 = por %p80, %p81
      %p84 = scmp.ne.s32.totalorder %s69, %s83
      %p85 = scmp.eq.s32.totalorder %s43, 0
      %p86 = por %p84, %p85
      %s88 = sadd.s32 %s87, 1
      %p91 = scmp.eq.s32.totalorder %s37, 1
      %p92 = scmp.ne.s32.totalorder %s87, %s89
      %p93 = scmp.eq.s32.totalorder %s37, 0
      %p94 = por %p92, %p93
      %p95 = scmp.ne.s32.totalorder %s87, %s89
      %p96 = scmp.eq.s32.totalorder %s42, 1
      %p97 = por %p95, %p96
      %p98 = scmp.ne.s32.totalorder %s89, %s90
      %p99 = scmp.eq.s32.totalorder %s42, 0
      %p100 = por %p98, %p99
      %p101 = scmp.ne.s32.totalorder %s89, %s90
      %p102 = scmp.eq.s32.totalorder %s43, 1
      %p103 = por %p101, %p102
      %p105 = scmp.ne.s32.totalorder %s90, %s104
      %p106 = scmp.eq.s32.totalorder %s43, 0
      %p107 = por %p105, %p106
      %s109 = sadd.s32 %s108, 1
      %p112 = scmp.eq.s32.totalorder %s37, 1
      %p113 = scmp.ne.s32.totalorder %s108, %s110
      %p114 = scmp.eq.s32.totalorder %s37, 0
      %p115 = por %p113, %p114
      %p116 = scmp.ne.s32.totalorder %s108, %s110
      %p117 = scmp.eq.s32.totalorder %s42, 1
      %p118 = por %p116, %p117
      %p119 = scmp.ne.s32.totalorder %s110, %s111
      %p120 = scmp.eq.s32.totalorder %s42, 0
      %p121 = por %p119, %p120
      %p122 = scmp.ne.s32.totalorder %s110, %s111
      %p123 = scmp.eq.s32.totalorder %s43, 1
      %p124 = por %p122, %p123
      %p126 = scmp.ne.s32.totalorder %s111, %s125
      %p127 = scmp.eq.s32.totalorder %s43, 0
      %p128 = por %p126, %p127
      %s130 = sadd.s32 %s129, 1
      %p133 = scmp.eq.s32.totalorder %s37, 1
      %p134 = scmp.ne.s32.totalorder %s129, %s131
      %p135 = scmp.eq.s32.totalorder %s37, 0
      %p136 = por %p134, %p135
      %p137 = scmp.ne.s32.totalorder %s129, %s131
      %p138 = scmp.eq.s32.totalorder %s42, 1
      %p139 = por %p137, %p138
      %p140 = scmp.ne.s32.totalorder %s131, %s132
      %p141 = scmp.eq.s32.totalorder %s42, 0
      %p142 = por %p140, %p141
      %p143 = scmp.ne.s32.totalorder %s131, %s132
      %p144 = scmp.eq.s32.totalorder %s43, 1
      %p145 = por %p143, %p144
      %p147 = scmp.ne.s32.totalorder %s132, %s146
      %p148 = scmp.eq.s32.totalorder %s43, 0
      %p149 = por %p147, %p148
      %s150 = ssub.s32 %s37, %s44
      %p151 = scmp.eq.s32.totalorder %s150, 0
      %s153 = sadd.s32 %s152, 1
      %s154 = scalar_select %p151, %s152, %s153
      %p157 = pneg %p151
      %p158 = scmp.eq.s32.totalorder %s37, 1
      %p159 = por %p157, %p158
      %p160 = scmp.ne.s32.totalorder %s152, %s155
      %p161 = scmp.eq.s32.totalorder %s37, 0
      %p162 = por %p160, %p161
      %p163 = scmp.ne.s32.totalorder %s152, %s155
      %p164 = scmp.eq.s32.totalorder %s42, 1
      %p165 = por %p163, %p164
      %p166 = scmp.ne.s32.totalorder %s155, %s156
      %p167 = scmp.eq.s32.totalorder %s42, 0
      %p168 = por %p166, %p167
      %p169 = scmp.ne.s32.totalorder %s155, %s156
      %p170 = scmp.eq.s32.totalorder %s43, 1
      %p171 = por %p169, %p170
      %p173 = scmp.ne.s32.totalorder %s156, %s172
      %p174 = scmp.eq.s32.totalorder %s43, 0
      %p175 = por %p173, %p174
      %s176 = ssub.s32 %s37, %s44
      %p177 = scmp.eq.s32.totalorder %s176, 0
      %s179 = sadd.s32 %s178, 1
      %s180 = scalar_select %p177, %s178, %s179
      %p183 = pneg %p177
      %p184 = scmp.eq.s32.totalorder %s37, 1
      %p185 = por %p183, %p184
      %p186 = scmp.ne.s32.totalorder %s178, %s181
      %p187 = scmp.eq.s32.totalorder %s37, 0
      %p188 = por %p186, %p187
      %p189 = scmp.ne.s32.totalorder %s178, %s181
      %p190 = scmp.eq.s32.totalorder %s42, 1
      %p191 = por %p189, %p190
      %p192 = scmp.ne.s32.totalorder %s181, %s182
      %p193 = scmp.eq.s32.totalorder %s42, 0
      %p194 = por %p192, %p193
      %p195 = scmp.ne.s32.totalorder %s181, %s182
      %p196 = scmp.eq.s32.totalorder %s43, 1
      %p197 = por %p195, %p196
      %p199 = scmp.ne.s32.totalorder %s182, %s198
      %p200 = scmp.eq.s32.totalorder %s43, 0
      %p201 = por %p199, %p200
      %s202 = ssub.s32 %s37, %s44
      %p203 = scmp.eq.s32.totalorder %s202, 0
      %s205 = sadd.s32 %s204, 1
      %s206 = scalar_select %p203, %s204, %s205
      %p209 = pneg %p203
      %p210 = scmp.eq.s32.totalorder %s37, 1
      %p211 = por %p209, %p210
      %p212 = scmp.ne.s32.totalorder %s204, %s207
      %p213 = scmp.eq.s32.totalorder %s37, 0
      %p214 = por %p212, %p213
      %p215 = scmp.ne.s32.totalorder %s204, %s207
      %p216 = scmp.eq.s32.totalorder %s42, 1
      %p217 = por %p215, %p216
      %p218 = scmp.ne.s32.totalorder %s207, %s208
      %p219 = scmp.eq.s32.totalorder %s42, 0
      %p220 = por %p218, %p219
      %p221 = scmp.ne.s32.totalorder %s207, %s208
      %p222 = scmp.eq.s32.totalorder %s43, 1
      %p223 = por %p221, %p222
      %p225 = scmp.ne.s32.totalorder %s208, %s224
      %p226 = scmp.eq.s32.totalorder %s43, 0
      %p227 = por %p225, %p226
      %s228 = ssub.s32 %s37, %s44
      %p229 = scmp.eq.s32.totalorder %s228, 0
      %s231 = sadd.s32 %s230, 1
      %s232 = scalar_select %p229, %s230, %s231
      %p235 = pneg %p229
      %p236 = scmp.eq.s32.totalorder %s37, 1
      %p237 = por %p235, %p236
      %p238 = scmp.ne.s32.totalorder %s230, %s233
      %p239 = scmp.eq.s32.totalorder %s37, 0
      %p240 = por %p238, %p239
      %p241 = scmp.ne.s32.totalorder %s230, %s233
      %p242 = scmp.eq.s32.totalorder %s42, 1
      %p243 = por %p241, %p242
      %p244 = scmp.ne.s32.totalorder %s233, %s234
      %p245 = scmp.eq.s32.totalorder %s42, 0
      %p246 = por %p244, %p245
      %p247 = scmp.ne.s32.totalorder %s233, %s234
      %p248 = scmp.eq.s32.totalorder %s43, 1
      %p249 = por %p247, %p248
      %p251 = scmp.ne.s32.totalorder %s234, %s250
      %p252 = scmp.eq.s32.totalorder %s43, 0
      %p253 = por %p251, %p252
      %s254 = ssub.s32 %s37, %s44
      %p255 = scmp.eq.s32.totalorder %s254, 0
      %s257 = sadd.s32 %s256, 1
      %s258 = scalar_select %p255, %s256, %s257
      %p261 = pneg %p255
      %p262 = scmp.eq.s32.totalorder %s37, 1
      %p263 = por %p261, %p262
      %p264 = scmp.ne.s32.totalorder %s256, %s259
      %p265 = scmp.eq.s32.totalorder %s37, 0
      %p266 = por %p264, %p265
      %p267 = scmp.ne.s32.totalorder %s256, %s259
      %p268 = scmp.eq.s32.totalorder %s42, 1
      %p269 = por %p267, %p268
      %p270 = scmp.ne.s32.totalorder %s259, %s260
      %p271 = scmp.eq.s32.totalorder %s42, 0
      %p272 = por %p270, %p271
      %p273 = scmp.ne.s32.totalorder %s259, %s260
      %p274 = scmp.eq.s32.totalorder %s43, 1
      %p275 = por %p273, %p274
      %p277 = scmp.ne.s32.totalorder %s260, %s276
      %p278 = scmp.eq.s32.totalorder %s43, 0
      %p279 = por %p277, %p278
      %s280 = ssub.s32 %s37, %s44
      %p281 = scmp.eq.s32.totalorder %s280, 0
      %s283 = sadd.s32 %s282, 1
      %s284 = scalar_select %p281, %s282, %s283
      %p287 = pneg %p281
      %p288 = scmp.eq.s32.totalorder %s37, 1
      %p289 = por %p287, %p288
      %p290 = scmp.ne.s32.totalorder %s282, %s285
      %p291 = scmp.eq.s32.totalorder %s37, 0
      %p292 = por %p290, %p291
      %p293 = scmp.ne.s32.totalorder %s282, %s285
      %p294 = scmp.eq.s32.totalorder %s42, 1
      %p295 = por %p293, %p294
      %p296 = scmp.ne.s32.totalorder %s285, %s286
      %p297 = scmp.eq.s32.totalorder %s42, 0
      %p298 = por %p296, %p297
      %p299 = scmp.ne.s32.totalorder %s285, %s286
      %p300 = scmp.eq.s32.totalorder %s43, 1
      %p301 = por %p299, %p300
      %p303 = scmp.ne.s32.totalorder %s286, %s302
      %p304 = scmp.eq.s32.totalorder %s43, 0
      %p305 = por %p303, %p304
      %s306 = ssub.s32 %s37, %s44
      %p307 = scmp.eq.s32.totalorder %s306, 0
      %s309 = sadd.s32 %s308, 1
      %s310 = scalar_select %p307, %s308, %s309
      %p313 = pneg %p307
      %p314 = scmp.eq.s32.totalorder %s37, 1
      %p315 = por %p313, %p314
      %p316 = scmp.ne.s32.totalorder %s308, %s311
      %p317 = scmp.eq.s32.totalorder %s37, 0
      %p318 = por %p316, %p317
      %p319 = scmp.ne.s32.totalorder %s308, %s311
      %p320 = scmp.eq.s32.totalorder %s42, 1
      %p321 = por %p319, %p320
      %p322 = scmp.ne.s32.totalorder %s311, %s312
      %p323 = scmp.eq.s32.totalorder %s42, 0
      %p324 = por %p322, %p323
      %p325 = scmp.ne.s32.totalorder %s311, %s312
      %p326 = scmp.eq.s32.totalorder %s43, 1
      %p327 = por %p325, %p326
      %p329 = scmp.ne.s32.totalorder %s312, %s328
      %p330 = scmp.eq.s32.totalorder %s43, 0
      %p331 = por %p329, %p330
      %s332 = ssub.s32 %s37, %s44
      %p333 = scmp.eq.s32.totalorder %s332, 0
      %s335 = sadd.s32 %s334, 1
      %s336 = scalar_select %p333, %s334, %s335
      %p339 = pneg %p333
      %p340 = scmp.eq.s32.totalorder %s37, 1
      %p341 = por %p339, %p340
      %p342 = scmp.ne.s32.totalorder %s334, %s337
      %p343 = scmp.eq.s32.totalorder %s37, 0
      %p344 = por %p342, %p343
      %p345 = scmp.ne.s32.totalorder %s334, %s337
      %p346 = scmp.eq.s32.totalorder %s42, 1
      %p347 = por %p345, %p346
      %p348 = scmp.ne.s32.totalorder %s337, %s338
      %p349 = scmp.eq.s32.totalorder %s42, 0
      %p350 = por %p348, %p349
      %p351 = scmp.ne.s32.totalorder %s337, %s338
      %p352 = scmp.eq.s32.totalorder %s43, 1
      %p353 = por %p351, %p352
      %p355 = scmp.ne.s32.totalorder %s338, %s354
      %p356 = scmp.eq.s32.totalorder %s43, 0
      %p357 = por %p355, %p356
      %s358 = ssub.s32 %s37, %s44
      %p359 = scmp.eq.s32.totalorder %s358, 0
      %s361 = sadd.s32 %s360, 1
      %s362 = scalar_select %p359, %s360, %s361
      %p365 = pneg %p359
      %p366 = scmp.eq.s32.totalorder %s37, 1
      %p367 = por %p365, %p366
      %p368 = scmp.ne.s32.totalorder %s360, %s363
      %p369 = scmp.eq.s32.totalorder %s37, 0
      %p370 = por %p368, %p369
      %p371 = scmp.ne.s32.totalorder %s360, %s363
      %p372 = scmp.eq.s32.totalorder %s42, 1
      %p373 = por %p371, %p372
      %p374 = scmp.ne.s32.totalorder %s363, %s364
      %p375 = scmp.eq.s32.totalorder %s42, 0
      %p376 = por %p374, %p375
      %p377 = scmp.ne.s32.totalorder %s363, %s364
      %p378 = scmp.eq.s32.totalorder %s43, 1
      %p379 = por %p377, %p378
      %p381 = scmp.ne.s32.totalorder %s364, %s380
      %p382 = scmp.eq.s32.totalorder %s43, 0
      %p383 = por %p381, %p382
      %s384 = ssub.s32 %s37, %s44
      %p385 = scmp.eq.s32.totalorder %s384, 0
      %s387 = sadd.s32 %s386, 1
      %s388 = scalar_select %p385, %s386, %s387
      %p391 = pneg %p385
      %p392 = scmp.eq.s32.totalorder %s37, 1
      %p393 = por %p391, %p392
      %p394 = scmp.ne.s32.totalorder %s386, %s389
      %p395 = scmp.eq.s32.totalorder %s37, 0
      %p396 = por %p394, %p395
      %p397 = scmp.ne.s32.totalorder %s386, %s389
      %p398 = scmp.eq.s32.totalorder %s42, 1
      %p399 = por %p397, %p398
      %p400 = scmp.ne.s32.totalorder %s389, %s390
      %p401 = scmp.eq.s32.totalorder %s42, 0
      %p402 = por %p400, %p401
      %p403 = scmp.ne.s32.totalorder %s389, %s390
      %p404 = scmp.eq.s32.totalorder %s43, 1
      %p405 = por %p403, %p404
      %p407 = scmp.ne.s32.totalorder %s390, %s406
      %p408 = scmp.eq.s32.totalorder %s43, 0
      %p409 = por %p407, %p408
      %s411 = sadd.s32 %s410, 1
      %p414 = scmp.eq.s32.totalorder %s37, 1
      %p415 = scmp.ne.s32.totalorder %s410, %s412
      %p416 = scmp.eq.s32.totalorder %s37, 0
      %p417 = por %p415, %p416
      %p418 = scmp.ne.s32.totalorder %s410, %s412
      %p419 = scmp.eq.s32.totalorder %s42, 1
      %p420 = por %p418, %p419
      %p421 = scmp.ne.s32.totalorder %s412, %s413
      %p422 = scmp.eq.s32.totalorder %s42, 0
      %p423 = por %p421, %p422
      %p424 = scmp.ne.s32.totalorder %s412, %s413
      %p425 = scmp.eq.s32.totalorder %s43, 1
      %p426 = por %p424, %p425
      %p428 = scmp.ne.s32.totalorder %s413, %s427
      %p429 = scmp.eq.s32.totalorder %s43, 0
      %p430 = por %p428, %p429
      %s432 = sadd.s32 %s431, 1
      %p435 = scmp.eq.s32.totalorder %s37, 1
      %p436 = scmp.ne.s32.totalorder %s431, %s433
      %p437 = scmp.eq.s32.totalorder %s37, 0
      %p438 = por %p436, %p437
      %p439 = scmp.ne.s32.totalorder %s431, %s433
      %p440 = scmp.eq.s32.totalorder %s42, 1
      %p441 = por %p439, %p440
      %p442 = scmp.ne.s32.totalorder %s433, %s434
      %p443 = scmp.eq.s32.totalorder %s42, 0
      %p444 = por %p442, %p443
      %p445 = scmp.ne.s32.totalorder %s433, %s434
      %p446 = scmp.eq.s32.totalorder %s43, 1
      %p447 = por %p445, %p446
      %p449 = scmp.ne.s32.totalorder %s434, %s448
      %p450 = scmp.eq.s32.totalorder %s43, 0
      %p451 = por %p449, %p450
      %p452 = scmp.le.s32.totalorder 1, %s37
      %p453 = scmp.lt.s32.totalorder %s37, 3
      %p454 = pnand %p452, %p453
      %p455 = pneg %p454
      // Predicated region
      $region9: #{_lambda_.1} parent=5 // pred_check
        _
      $region10: #{_lambda_.1} parent=5 // pred_check_branch
        %457 = sbr.rel (%p454) target = $region12
      $region11: #{_lambda_.1} parent=5 // pred_region
        %s458 = ssub.s32 %s37, 1
        // Predicated region
        $region13: #{_lambda_.1} parent=11 // pred_check
          %p459 = pneg %p58
        $region14: #{_lambda_.1} parent=11 // pred_check_branch
          %461 = sbr.rel (%p459) target = $region16
        $region15: #{_lambda_.1} parent=11 // pred_region
          _
        $region16: #{_lambda_.1} parent=11 // pred_fallthru
          _
        // Predicated region
        $region17: #{_lambda_.1} parent=11 // pred_check
          %p462 = pneg %p79
        $region18: #{_lambda_.1} parent=11 // pred_check_branch
          %464 = sbr.rel (%p462) target = $region20
        $region19: #{_lambda_.1} parent=11 // pred_region
          _
        $region20: #{_lambda_.1} parent=11 // pred_fallthru
          _
        // Predicated region
        $region21: #{_lambda_.1} parent=11 // pred_check
          %p465 = pneg %p100
        $region22: #{_lambda_.1} parent=11 // pred_check_branch
          %467 = sbr.rel (%p465) target = $region24
        $region23: #{_lambda_.1} parent=11 // pred_region
          _
        $region24: #{_lambda_.1} parent=11 // pred_fallthru
          _
        // Predicated region
        $region25: #{_lambda_.1} parent=11 // pred_check
          %p468 = pneg %p121
        $region26: #{_lambda_.1} parent=11 // pred_check_branch
          %470 = sbr.rel (%p468) target = $region28
        $region27: #{_lambda_.1} parent=11 // pred_region
          _
        $region28: #{_lambda_.1} parent=11 // pred_fallthru
          _
        // Predicated region
        $region29: #{_lambda_.1} parent=11 // pred_check
          %p471 = pneg %p142
        $region30: #{_lambda_.1} parent=11 // pred_check_branch
          %473 = sbr.rel (%p471) target = $region32
        $region31: #{_lambda_.1} parent=11 // pred_region
          _
        $region32: #{_lambda_.1} parent=11 // pred_fallthru
          _
      $region12: #{_lambda_.1} parent=5 // pred_fallthru
        _
      %p474 = scmp.lt.s32.totalorder %s37, 2
      // Predicated region
      $region33: #{_lambda_.1} parent=5 // pred_check
        %p475 = pneg %p474
      $region34: #{_lambda_.1} parent=5 // pred_check_branch
        %477 = sbr.rel (%p475) target = $region36
      $region35: #{_lambda_.1} parent=5 // pred_region
        // Predicated region
        $region37: #{_lambda_.1} parent=35 // pred_check
          %p478 = pneg %p162
        $region38: #{_lambda_.1} parent=35 // pred_check_branch
          %480 = sbr.rel (%p478) target = $region40
        $region39: #{_lambda_.1} parent=35 // pred_region
          %s481 = sand.u32 %s152, 1
          %s482 = scalar_lea.sflag [#allocation4], %s481
          %s483 = sand.u32 %s152, 1
          %s484 = smul.addr %s483, 128
          %s485 = scalar_lea.vmem [#allocation3], %s484
          %s487 = ssub.s32 2048, 2048
          %488 = vsyncadd %s482, %s487
          %s489 = smul.addr %s37, 16
          %s490 = smul.addr %s489, 128
          %s491 = scalar_lea.hbm %s5, %s490
          %s492 = sshll.u32 %s485, 4
          %s493 = int_to_ptr.vmem [resolvable:$true] %s492
          %498 = dma.hbm_to_vmem [thread:$0]  %s491, 2048, %s493, %s482, 128, 128, 8
        $region40: #{_lambda_.1} parent=35 // pred_fallthru
          _
        // Predicated region
        $region41: #{_lambda_.1} parent=35 // pred_check
          %p499 = pneg %p188
        $region42: #{_lambda_.1} parent=35 // pred_check_branch
          %501 = sbr.rel (%p499) target = $region44
        $region43: #{_lambda_.1} parent=35 // pred_region
          %s502 = sand.u32 %s37, 1
          %s503 = scalar_lea.sflag [#allocation7], %s502
          %s504 = sand.u32 %s178, 1
          %s505 = smul.addr %s504, 128
          %s506 = scalar_lea.vmem [#allocation6], %s505
          %s508 = ssub.s32 2048, 2048
          %509 = vsyncadd %s503, %s508
          %s510 = smul.addr %s37, 16
          %s511 = smul.addr %s510, 128
          %s512 = scalar_lea.hbm %s6, %s511
          %s513 = sshll.u32 %s506, 4
          %s514 = int_to_ptr.vmem [resolvable:$true] %s513
          %519 = dma.hbm_to_vmem [thread:$0]  %s512, 2048, %s514, %s503, 128, 128, 8
        $region44: #{_lambda_.1} parent=35 // pred_fallthru
          _
        // Predicated region
        $region45: #{_lambda_.1} parent=35 // pred_check
          %p520 = pneg %p214
        $region46: #{_lambda_.1} parent=35 // pred_check_branch
          %522 = sbr.rel (%p520) target = $region48
        $region47: #{_lambda_.1} parent=35 // pred_region
          %s523 = sand.u32 %s37, 1
          %s524 = scalar_lea.sflag [#allocation7], %s523
          %s525 = sand.u32 %s204, 1
          %s526 = smul.addr %s525, 128
          %s527 = scalar_lea.vmem [#allocation8], %s526
          %s529 = ssub.s32 2048, 2048
          %530 = vsyncadd %s524, %s529
          %s531 = smul.addr %s37, 16
          %s532 = smul.addr %s531, 128
          %s533 = scalar_lea.hbm %s7, %s532
          %s534 = sshll.u32 %s527, 4
          %s535 = int_to_ptr.vmem [resolvable:$true] %s534
          %540 = dma.hbm_to_vmem [thread:$0]  %s533, 2048, %s535, %s524, 128, 128, 8
        $region48: #{_lambda_.1} parent=35 // pred_fallthru
          _
        // Predicated region
        $region49: #{_lambda_.1} parent=35 // pred_check
          %p541 = pneg %p240
        $region50: #{_lambda_.1} parent=35 // pred_check_branch
          %543 = sbr.rel (%p541) target = $region52
        $region51: #{_lambda_.1} parent=35 // pred_region
          %p544 = scmp.lt.s32.totalorder %s37, 1
          %s545 = scalar_select %p544, %s37, 1
          %s546 = scalar_lea.vmem %s8, %s545
        $region52: #{_lambda_.1} parent=35 // pred_fallthru
          _
        // Predicated region
        $region53: #{_lambda_.1} parent=35 // pred_check
          %p547 = pneg %p266
        $region54: #{_lambda_.1} parent=35 // pred_check_branch
          %549 = sbr.rel (%p547) target = $region56
        $region55: #{_lambda_.1} parent=35 // pred_region
          %s550 = sand.u32 %s37, 1
          %s551 = scalar_lea.sflag [#allocation10], %s550
          %s552 = sand.u32 %s256, 1
          %s553 = smul.addr %s552, 128
          %s554 = scalar_lea.vmem [#allocation9], %s553
          %s556 = ssub.s32 2048, 2048
          %557 = vsyncadd %s551, %s556
          %s558 = smul.addr %s37, 16
          %s559 = smul.addr %s558, 128
          %s560 = scalar_lea.hbm %s9, %s559
          %s561 = sshll.u32 %s554, 4
          %s562 = int_to_ptr.vmem [resolvable:$true] %s561
          %567 = dma.hbm_to_vmem [thread:$0]  %s560, 2048, %s562, %s551, 128, 128, 8
        $region56: #{_lambda_.1} parent=35 // pred_fallthru
          _
        // Predicated region
        $region57: #{_lambda_.1} parent=35 // pred_check
          %p568 = pneg %p292
        $region58: #{_lambda_.1} parent=35 // pred_check_branch
          %570 = sbr.rel (%p568) target = $region60
        $region59: #{_lambda_.1} parent=35 // pred_region
          %p571 = scmp.lt.s32.totalorder %s37, 1
          %s572 = scalar_select %p571, %s37, 1
          %s573 = scalar_lea.vmem %s10, %s572
        $region60: #{_lambda_.1} parent=35 // pred_fallthru
          _
        // Predicated region
        $region61: #{_lambda_.1} parent=35 // pred_check
          %p574 = pneg %p318
        $region62: #{_lambda_.1} parent=35 // pred_check_branch
          %576 = sbr.rel (%p574) target = $region64
        $region63: #{_lambda_.1} parent=35 // pred_region
          %s577 = sand.u32 %s37, 1
          %s578 = scalar_lea.sflag [#allocation10], %s577
          %s579 = sand.u32 %s308, 1
          %s580 = smul.addr %s579, 256
          %s581 = scalar_lea.vmem [#allocation11], %s580
          %s583 = ssub.s32 4096, 4096
          %584 = vsyncadd %s578, %s583
          %s585 = smul.addr %s37, 32
          %s586 = smul.addr %s585, 128
          %s587 = scalar_lea.hbm %s11, %s586
          %s588 = sshll.u32 %s581, 4
          %s589 = int_to_ptr.vmem [resolvable:$true] %s588
          %594 = dma.hbm_to_vmem [thread:$0]  %s587, 4096, %s589, %s578, 128, 128, 8
        $region64: #{_lambda_.1} parent=35 // pred_fallthru
          _
        // Predicated region
        $region65: #{_lambda_.1} parent=35 // pred_check
          %p595 = pneg %p344
        $region66: #{_lambda_.1} parent=35 // pred_check_branch
          %597 = sbr.rel (%p595) target = $region68
        $region67: #{_lambda_.1} parent=35 // pred_region
          %p598 = scmp.lt.s32.totalorder %s37, 1
          %s599 = scalar_select %p598, %s37, 1
          %s600 = scalar_lea.vmem %s12, %s599
        $region68: #{_lambda_.1} parent=35 // pred_fallthru
          _
        // Predicated region
        $region69: #{_lambda_.1} parent=35 // pred_check
          %p601 = pneg %p370
        $region70: #{_lambda_.1} parent=35 // pred_check_branch
          %603 = sbr.rel (%p601) target = $region72
        $region71: #{_lambda_.1} parent=35 // pred_region
          %s604 = sand.u32 %s360, 1
          %s605 = scalar_lea.sflag [#allocation13], %s604
          %s606 = sand.u32 %s360, 1
          %s607 = smul.addr %s606, 128
          %s608 = scalar_lea.vmem [#allocation12], %s607
          %s610 = ssub.s32 2048, 2048
          %611 = vsyncadd %s605, %s610
          %s612 = smul.addr %s37, 16
          %s613 = smul.addr %s612, 128
          %s614 = scalar_lea.hbm %s13, %s613
          %s615 = sshll.u32 %s608, 4
          %s616 = int_to_ptr.vmem [resolvable:$true] %s615
          %621 = dma.hbm_to_vmem [thread:$0]  %s614, 2048, %s616, %s605, 128, 128, 8
        $region72: #{_lambda_.1} parent=35 // pred_fallthru
          _
        // Predicated region
        $region73: #{_lambda_.1} parent=35 // pred_check
          %p622 = pneg %p396
        $region74: #{_lambda_.1} parent=35 // pred_check_branch
          %624 = sbr.rel (%p622) target = $region76
        $region75: #{_lambda_.1} parent=35 // pred_region
          %p625 = scmp.lt.s32.totalorder %s37, 1
          %s626 = scalar_select %p625, %s37, 1
          %s627 = scalar_lea.vmem %s14, %s626
        $region76: #{_lambda_.1} parent=35 // pred_fallthru
          _
      $region36: #{_lambda_.1} parent=5 // pred_fallthru
        _
      %p628 = scmp.le.s32.totalorder 1, %s37
      %p629 = scmp.lt.s32.totalorder %s37, 3
      %p630 = pnand %p628, %p629
      %p631 = pneg %p630
      // Predicated region
      $region77: #{_lambda_.1} parent=5 // pred_check
        _
      $region78: #{_lambda_.1} parent=5 // pred_check_branch
        %633 = sbr.rel (%p630) target = $region80
      $region79: #{_lambda_.1} parent=5 // pred_region
        %s634 = ssub.s32 %s37, 1
        %s635 = sand.u32 %s155, 1
        %s636 = scalar_lea.sflag [#allocation4], %s635
        %s637 = sand.u32 %s155, 1
        %s638 = smul.addr %s637, 128
        %s639 = scalar_lea.vmem [#allocation3], %s638
        // Predicated region
        $region81: #{_lambda_.1} parent=79 // pred_check
          %p640 = pneg %p168
        $region82: #{_lambda_.1} parent=79 // pred_check_branch
          %642 = sbr.rel (%p640) target = $region84
        $region83: #{_lambda_.1} parent=79 // pred_region
          %643 = dma.done %s636, 2048
        $region84: #{_lambda_.1} parent=79 // pred_fallthru
          _
        %s644 = sand.u32 %s42, 1
        %s645 = scalar_lea.sflag [#allocation7], %s644
        %s646 = sand.u32 %s181, 1
        %s647 = smul.addr %s646, 128
        %s648 = scalar_lea.vmem [#allocation6], %s647
        // Predicated region
        $region85: #{_lambda_.1} parent=79 // pred_check
          %p649 = pneg %p194
        $region86: #{_lambda_.1} parent=79 // pred_check_branch
          %651 = sbr.rel (%p649) target = $region88
        $region87: #{_lambda_.1} parent=79 // pred_region
          %652 = dma.done %s645, 2048
        $region88: #{_lambda_.1} parent=79 // pred_fallthru
          _
        %s653 = sand.u32 %s42, 1
        %s654 = scalar_lea.sflag [#allocation7], %s653
        %s655 = sand.u32 %s207, 1
        %s656 = smul.addr %s655, 128
        %s657 = scalar_lea.vmem [#allocation8], %s656
        // Predicated region
        $region89: #{_lambda_.1} parent=79 // pred_check
          %p658 = pneg %p220
        $region90: #{_lambda_.1} parent=79 // pred_check_branch
          %660 = sbr.rel (%p658) target = $region92
        $region91: #{_lambda_.1} parent=79 // pred_region
          %661 = dma.done %s654, 2048
        $region92: #{_lambda_.1} parent=79 // pred_fallthru
          _
        %s662 = sand.u32 %s42, 1
        %s663 = scalar_lea.sflag [#allocation10], %s662
        %s664 = sand.u32 %s259, 1
        %s665 = smul.addr %s664, 128
        %s666 = scalar_lea.vmem [#allocation9], %s665
        // Predicated region
        $region93: #{_lambda_.1} parent=79 // pred_check
          %p667 = pneg %p272
        $region94: #{_lambda_.1} parent=79 // pred_check_branch
          %669 = sbr.rel (%p667) target = $region96
        $region95: #{_lambda_.1} parent=79 // pred_region
          %670 = dma.done %s663, 2048
        $region96: #{_lambda_.1} parent=79 // pred_fallthru
          _
        %s671 = sand.u32 %s42, 1
        %s672 = scalar_lea.sflag [#allocation10], %s671
        %s673 = sand.u32 %s311, 1
        %s674 = smul.addr %s673, 256
        %s675 = scalar_lea.vmem [#allocation11], %s674
        // Predicated region
        $region97: #{_lambda_.1} parent=79 // pred_check
          %p676 = pneg %p324
        $region98: #{_lambda_.1} parent=79 // pred_check_branch
          %678 = sbr.rel (%p676) target = $region100
        $region99: #{_lambda_.1} parent=79 // pred_region
          %679 = dma.done %s672, 4096
        $region100: #{_lambda_.1} parent=79 // pred_fallthru
          _
        %s680 = sand.u32 %s363, 1
        %s681 = scalar_lea.sflag [#allocation13], %s680
        %s682 = sand.u32 %s363, 1
        %s683 = smul.addr %s682, 128
        %s684 = scalar_lea.vmem [#allocation12], %s683
        // Predicated region
        $region101: #{_lambda_.1} parent=79 // pred_check
          %p685 = pneg %p376
        $region102: #{_lambda_.1} parent=79 // pred_check_branch
          %687 = sbr.rel (%p685) target = $region104
        $region103: #{_lambda_.1} parent=79 // pred_region
          %688 = dma.done %s681, 2048
        $region104: #{_lambda_.1} parent=79 // pred_fallthru
          _
        %p689 = pneg %p58
        %p690 = pneg %p55
        %p691 = pneg %p79
        %p692 = pneg %p76
        %p693 = pneg %p100
        %p694 = pneg %p97
        %p695 = pneg %p121
        %p696 = pneg %p118
        %p697 = pneg %p142
        %p698 = pneg %p139
        %s699 = sand.u32 %s155, 1
        %s700 = scalar_lea.sflag [#allocation4], %s699
        %s701 = sand.u32 %s155, 1
        %s702 = smul.addr %s701, 128
        %s703 = scalar_lea.vmem [#allocation3], %s702
        %p704 = pneg %p168
        %p705 = pneg %p165
        %s706 = sand.u32 %s42, 1
        %s707 = scalar_lea.sflag [#allocation7], %s706
        %s708 = sand.u32 %s181, 1
        %s709 = smul.addr %s708, 128
        %s710 = scalar_lea.vmem [#allocation6], %s709
        %p711 = pneg %p194
        %p712 = pneg %p191
        %s713 = sand.u32 %s42, 1
        %s714 = scalar_lea.sflag [#allocation7], %s713
        %s715 = sand.u32 %s207, 1
        %s716 = smul.addr %s715, 128
        %s717 = scalar_lea.vmem [#allocation8], %s716
        %p718 = pneg %p220
        %p719 = pneg %p217
        %p720 = scmp.lt.s32.totalorder %s42, 1
        %s721 = scalar_select %p720, %s42, 1
        %s722 = scalar_lea.vmem %s8, %s721
        %p723 = pneg %p246
        %p724 = pneg %p243
        %s725 = sand.u32 %s42, 1
        %s726 = scalar_lea.sflag [#allocation10], %s725
        %s727 = sand.u32 %s259, 1
        %s728 = smul.addr %s727, 128
        %s729 = scalar_lea.vmem [#allocation9], %s728
        %p730 = pneg %p272
        %p731 = pneg %p269
        %p732 = scmp.lt.s32.totalorder %s42, 1
        %s733 = scalar_select %p732, %s42, 1
        %s734 = scalar_lea.vmem %s10, %s733
        %p735 = pneg %p298
        %p736 = pneg %p295
        %s737 = sand.u32 %s42, 1
        %s738 = scalar_lea.sflag [#allocation10], %s737
        %s739 = sand.u32 %s311, 1
        %s740 = smul.addr %s739, 256
        %s741 = scalar_lea.vmem [#allocation11], %s740
        %p742 = pneg %p324
        %p743 = pneg %p321
        %p744 = scmp.lt.s32.totalorder %s42, 1
        %s745 = scalar_select %p744, %s42, 1
        %s746 = scalar_lea.vmem %s12, %s745
        %p747 = pneg %p350
        %p748 = pneg %p347
        %s749 = sand.u32 %s363, 1
        %s750 = scalar_lea.sflag [#allocation13], %s749
        %s751 = sand.u32 %s363, 1
        %s752 = smul.addr %s751, 128
        %s753 = scalar_lea.vmem [#allocation12], %s752
        %p754 = pneg %p376
        %p755 = pneg %p373
        %p756 = scmp.lt.s32.totalorder %s42, 1
        %s757 = scalar_select %p756, %s42, 1
        %s758 = scalar_lea.vmem %s14, %s757
        %p759 = pneg %p402
        %p760 = pneg %p399
        %p761 = pneg %p423
        %p762 = pneg %p420
        %p763 = pneg %p444
        %p764 = pneg %p441
        %p765 = scmp.lt.s32.totalorder %s42, 1
        %s766 = scalar_select %p765, %s42, 1
        %s767 = scalar_lea.vmem %s8, %s766
        %p768 = scmp.lt.s32.totalorder %s42, 1
        %s769 = scalar_select %p768, %s42, 1
        %s770 = scalar_lea.vmem %s10, %s769
        %p771 = scmp.lt.s32.totalorder %s42, 1
        %s772 = scalar_select %p771, %s42, 1
        %s773 = scalar_lea.vmem %s12, %s772
        %p774 = scmp.lt.s32.totalorder %s42, 1
        %s775 = scalar_select %p774, %s42, 1
        %s776 = scalar_lea.vmem %s14, %s775
        %p777 = scmp.eq.s32.totalorder %s42, 0
        // Predicated region
        $region105: #{_lambda_.1} parent=79 // pred_check
          %p778 = pneg %p777
        $region106: #{_lambda_.1} parent=79 // pred_check_branch
          %780 = sbr.rel (%p778) target = $region108
        $region107: #{_lambda_.1} parent=79 // pred_region
          %v781 = vld [vmem:[%s3] sm:$0xff]
          %v782 = vld [vmem:[%s3 + $0x8] sm:$0xff]
          %783 = vst [vmem:[#allocation14] sm:$0xff] %v781
          %784 = vst [vmem:[#allocation14 + $0x8] sm:$0xff] %v782
          %v785 = vld [vmem:[%s4] sm:$0xff]
          %v786 = vld [vmem:[%s4 + $0x8] sm:$0xff]
          %v787 = vld [vmem:[%s4 + $0x10] sm:$0xff]
          %v788 = vld [vmem:[%s4 + $0x18] sm:$0xff]
          %789 = vst [vmem:[#allocation15] sm:$0xff] %v785
          %790 = vst [vmem:[#allocation15 + $0x8] sm:$0xff] %v786
          %791 = vst [vmem:[#allocation15 + $0x10] sm:$0xff] %v787
          %792 = vst [vmem:[#allocation15 + $0x18] sm:$0xff] %v788
        $region108: #{_lambda_.1} parent=79 // pred_fallthru
          _
        %v793 = vld [vmem:[#allocation14] sm:$0xff]
        %v794 = vld [vmem:[#allocation14 + $0x8] sm:$0xff]
        %v795 = vld [vmem:[%s639] sm:$0xff]
        %v796 = vld [vmem:[%s639 + $0x8] sm:$0xff]
        %v797 = vld [vmem:[%s639 + $0x10] sm:$0xff]
        %v798 = vld [vmem:[%s639 + $0x18] sm:$0xff]
        %v799 = vld [vmem:[%s639 + $0x20] sm:$0xff]
        %v800 = vld [vmem:[%s639 + $0x28] sm:$0xff]
        %v801 = vld [vmem:[%s639 + $0x30] sm:$0xff]
        %v802 = vld [vmem:[%s639 + $0x38] sm:$0xff]
        %v803 = vld [vmem:[%s639 + $0x40] sm:$0xff]
        %v804 = vld [vmem:[%s639 + $0x48] sm:$0xff]
        %v805 = vld [vmem:[%s639 + $0x50] sm:$0xff]
        %v806 = vld [vmem:[%s639 + $0x58] sm:$0xff]
        %v807 = vld [vmem:[%s639 + $0x60] sm:$0xff]
        %v808 = vld [vmem:[%s639 + $0x68] sm:$0xff]
        %v809 = vld [vmem:[%s639 + $0x70] sm:$0xff]
        %v810 = vld [vmem:[%s639 + $0x78] sm:$0xff]
        %811 = vmatprep.subr.mxu0 0.0
        %812 = vmatpush1.msra.mxu0 %v810
        %813 = vmatprep.subr.mxu0 0.0
        %814 = vmatpush1.msra.mxu0 %v809
        %815 = vmatprep.subr.mxu0 0.0
        %816 = vmatpush1.msra.mxu0 %v808
        %817 = vmatprep.subr.mxu0 0.0
        %818 = vmatpush1.msra.mxu0 %v807
        %819 = vmatprep.subr.mxu0 0.0
        %820 = vmatpush1.msra.mxu0 %v806
        %821 = vmatprep.subr.mxu0 0.0
        %822 = vmatpush1.msra.mxu0 %v805
        %823 = vmatprep.subr.mxu0 0.0
        %824 = vmatpush1.msra.mxu0 %v804
        %825 = vmatprep.subr.mxu0 0.0
        %826 = vmatpush1.msra.mxu0 %v803
        %827 = vmatprep.subr.mxu0 0.0
        %828 = vmatpush1.msra.mxu0 %v802
        %829 = vmatprep.subr.mxu0 0.0
        %830 = vmatpush1.msra.mxu0 %v801
        %831 = vmatprep.subr.mxu0 0.0
        %832 = vmatpush1.msra.mxu0 %v800
        %833 = vmatprep.subr.mxu0 0.0
        %834 = vmatpush1.msra.mxu0 %v799
        %835 = vmatprep.subr.mxu0 0.0
        %836 = vmatpush1.msra.mxu0 %v798
        %837 = vmatprep.subr.mxu0 0.0
        %838 = vmatpush1.msra.mxu0 %v797
        %839 = vmatprep.subr.mxu0 0.0
        %840 = vmatpush1.msra.mxu0 %v796
        %841 = vmatprep.subr.mxu0 0.0
        %842 = vmatpush1.msra.mxu0 %v795
        %843 = vmatprep.subr.mxu0 0.0
        %844 = vmatpush2.msra.mxu0 0.0
        %845 = vmatprep.subr.mxu0 0.0
        %846 = vmatpush2.msra.mxu0 0.0
        %847 = vmatprep.subr.mxu0 0.0
        %848 = vmatpush2.msra.mxu0 0.0
        %849 = vmatprep.subr.mxu0 0.0
        %850 = vmatpush2.msra.mxu0 0.0
        %851 = vmatprep.subr.mxu0 0.0
        %852 = vmatpush2.msra.mxu0 0.0
        %853 = vmatprep.subr.mxu0 0.0
        %854 = vmatpush2.msra.mxu0 0.0
        %855 = vmatprep.subr.mxu0 0.0
        %856 = vmatpush2.msra.mxu0 0.0
        %857 = vmatprep.subr.mxu0 0.0
        %858 = vmatpush2.msra.mxu0 0.0
        %859 = vmatprep.subr.mxu0 0.0
        %860 = vmatpush2.msra.mxu0 0.0
        %861 = vmatprep.subr.mxu0 0.0
        %862 = vmatpush2.msra.mxu0 0.0
        %863 = vmatprep.subr.mxu0 0.0
        %864 = vmatpush2.msra.mxu0 0.0
        %865 = vmatprep.subr.mxu0 0.0
        %866 = vmatpush2.msra.mxu0 0.0
        %867 = vmatprep.subr.mxu0 0.0
        %868 = vmatpush2.msra.mxu0 0.0
        %869 = vmatprep.subr.mxu0 0.0
        %870 = vmatpush2.msra.mxu0 0.0
        %871 = vmatprep.subr.mxu0 0.0
        %872 = vmatpush2.msra.mxu0 0.0
        %873 = vmatprep.subr.mxu0 0.0
        %874 = vmatpush2.msra.mxu0 0.0
        %875 = vmatprep.mubr.f32.mxu0 0.0
        %876 = vmatmul.mubr.f32.gmra.mxu0 %v793
        %v877 = vpop.f32.mrf.mxu0
        %v878 = vadd.f32 0.0, %v877
        %v879 = vpop.f32.mrf.mxu0
        %880 = vmatprep.mubr.f32.mxu0 0.0
        %881 = vmatmul.mubr.f32.gmra.mxu0 %v794
        %v882 = vpop.f32.mrf.mxu0
        %v883 = vadd.f32 0.0, %v882
        %v884 = vpop.f32.mrf.mxu0
        %885 = vdwg.mxu0
        %v886 = vld [vmem:[%s648] sm:$0xff]
        %v887 = vld [vmem:[%s648 + $0x8] sm:$0xff]
        %v888 = vld [vmem:[%s648 + $0x10] sm:$0xff]
        %v889 = vld [vmem:[%s648 + $0x18] sm:$0xff]
        %v890 = vld [vmem:[%s648 + $0x20] sm:$0xff]
        %v891 = vld [vmem:[%s648 + $0x28] sm:$0xff]
        %v892 = vld [vmem:[%s648 + $0x30] sm:$0xff]
        %v893 = vld [vmem:[%s648 + $0x38] sm:$0xff]
        %v894 = vld [vmem:[%s648 + $0x40] sm:$0xff]
        %v895 = vld [vmem:[%s648 + $0x48] sm:$0xff]
        %v896 = vld [vmem:[%s648 + $0x50] sm:$0xff]
        %v897 = vld [vmem:[%s648 + $0x58] sm:$0xff]
        %v898 = vld [vmem:[%s648 + $0x60] sm:$0xff]
        %v899 = vld [vmem:[%s648 + $0x68] sm:$0xff]
        %v900 = vld [vmem:[%s648 + $0x70] sm:$0xff]
        %v901 = vld [vmem:[%s648 + $0x78] sm:$0xff]
        %902 = vmatprep.subr.mxu0 0.0
        %903 = vmatpush1.msra.mxu0 %v901
        %904 = vmatprep.subr.mxu0 0.0
        %905 = vmatpush1.msra.mxu0 %v900
        %906 = vmatprep.subr.mxu0 0.0
        %907 = vmatpush1.msra.mxu0 %v899
        %908 = vmatprep.subr.mxu0 0.0
        %909 = vmatpush1.msra.mxu0 %v898
        %910 = vmatprep.subr.mxu0 0.0
        %911 = vmatpush1.msra.mxu0 %v897
        %912 = vmatprep.subr.mxu0 0.0
        %913 = vmatpush1.msra.mxu0 %v896
        %914 = vmatprep.subr.mxu0 0.0
        %915 = vmatpush1.msra.mxu0 %v895
        %916 = vmatprep.subr.mxu0 0.0
        %917 = vmatpush1.msra.mxu0 %v894
        %918 = vmatprep.subr.mxu0 0.0
        %919 = vmatpush1.msra.mxu0 %v893
        %920 = vmatprep.subr.mxu0 0.0
        %921 = vmatpush1.msra.mxu0 %v892
        %922 = vmatprep.subr.mxu0 0.0
        %923 = vmatpush1.msra.mxu0 %v891
        %924 = vmatprep.subr.mxu0 0.0
        %925 = vmatpush1.msra.mxu0 %v890
        %926 = vmatprep.subr.mxu0 0.0
        %927 = vmatpush1.msra.mxu0 %v889
        %928 = vmatprep.subr.mxu0 0.0
        %929 = vmatpush1.msra.mxu0 %v888
        %930 = vmatprep.subr.mxu0 0.0
        %931 = vmatpush1.msra.mxu0 %v887
        %932 = vmatprep.subr.mxu0 0.0
        %933 = vmatpush1.msra.mxu0 %v886
        %934 = vmatprep.subr.mxu0 0.0
        %935 = vmatpush2.msra.mxu0 0.0
        %936 = vmatprep.subr.mxu0 0.0
        %937 = vmatpush2.msra.mxu0 0.0
        %938 = vmatprep.subr.mxu0 0.0
        %939 = vmatpush2.msra.mxu0 0.0
        %940 = vmatprep.subr.mxu0 0.0
        %941 = vmatpush2.msra.mxu0 0.0
        %942 = vmatprep.subr.mxu0 0.0
        %943 = vmatpush2.msra.mxu0 0.0
        %944 = vmatprep.subr.mxu0 0.0
        %945 = vmatpush2.msra.mxu0 0.0
        %946 = vmatprep.subr.mxu0 0.0
        %947 = vmatpush2.msra.mxu0 0.0
        %948 = vmatprep.subr.mxu0 0.0
        %949 = vmatpush2.msra.mxu0 0.0
        %950 = vmatprep.subr.mxu0 0.0
        %951 = vmatpush2.msra.mxu0 0.0
        %952 = vmatprep.subr.mxu0 0.0
        %953 = vmatpush2.msra.mxu0 0.0
        %954 = vmatprep.subr.mxu0 0.0
        %955 = vmatpush2.msra.mxu0 0.0
        %956 = vmatprep.subr.mxu0 0.0
        %957 = vmatpush2.msra.mxu0 0.0
        %958 = vmatprep.subr.mxu0 0.0
        %959 = vmatpush2.msra.mxu0 0.0
        %960 = vmatprep.subr.mxu0 0.0
        %961 = vmatpush2.msra.mxu0 0.0
        %962 = vmatprep.subr.mxu0 0.0
        %963 = vmatpush2.msra.mxu0 0.0
        %964 = vmatprep.subr.mxu0 0.0
        %965 = vmatpush2.msra.mxu0 0.0
        %966 = vmatprep.mubr.f32.mxu0 0.0
        %967 = vmatmul.mubr.f32.gmra.mxu0 %v793
        %v968 = vpop.f32.mrf.mxu0
        %v969 = vadd.f32 0.0, %v968
        %v970 = vpop.f32.mrf.mxu0
        %971 = vmatprep.mubr.f32.mxu0 0.0
        %972 = vmatmul.mubr.f32.gmra.mxu0 %v794
        %v973 = vpop.f32.mrf.mxu0
        %v974 = vadd.f32 0.0, %v973
        %v975 = vpop.f32.mrf.mxu0
        %976 = vdwg.mxu0
        %v977 = vld [vmem:[%s657] sm:$0xff]
        %v978 = vld [vmem:[%s657 + $0x8] sm:$0xff]
        %v979 = vld [vmem:[%s657 + $0x10] sm:$0xff]
        %v980 = vld [vmem:[%s657 + $0x18] sm:$0xff]
        %v981 = vld [vmem:[%s657 + $0x20] sm:$0xff]
        %v982 = vld [vmem:[%s657 + $0x28] sm:$0xff]
        %v983 = vld [vmem:[%s657 + $0x30] sm:$0xff]
        %v984 = vld [vmem:[%s657 + $0x38] sm:$0xff]
        %v985 = vld [vmem:[%s657 + $0x40] sm:$0xff]
        %v986 = vld [vmem:[%s657 + $0x48] sm:$0xff]
        %v987 = vld [vmem:[%s657 + $0x50] sm:$0xff]
        %v988 = vld [vmem:[%s657 + $0x58] sm:$0xff]
        %v989 = vld [vmem:[%s657 + $0x60] sm:$0xff]
        %v990 = vld [vmem:[%s657 + $0x68] sm:$0xff]
        %v991 = vld [vmem:[%s657 + $0x70] sm:$0xff]
        %v992 = vld [vmem:[%s657 + $0x78] sm:$0xff]
        %v993 = vld [vmem:[%s767] sm:$0x1]
        %v994 = vld [vmem:[%s666] sm:$0xff]
        %v995 = vld [vmem:[%s666 + $0x8] sm:$0xff]
        %v996 = vld [vmem:[%s666 + $0x10] sm:$0xff]
        %v997 = vld [vmem:[%s666 + $0x18] sm:$0xff]
        %v998 = vld [vmem:[%s666 + $0x20] sm:$0xff]
        %v999 = vld [vmem:[%s666 + $0x28] sm:$0xff]
        %v1000 = vld [vmem:[%s666 + $0x30] sm:$0xff]
        %v1001 = vld [vmem:[%s666 + $0x38] sm:$0xff]
        %v1002 = vld [vmem:[%s666 + $0x40] sm:$0xff]
        %v1003 = vld [vmem:[%s666 + $0x48] sm:$0xff]
        %v1004 = vld [vmem:[%s666 + $0x50] sm:$0xff]
        %v1005 = vld [vmem:[%s666 + $0x58] sm:$0xff]
        %v1006 = vld [vmem:[%s666 + $0x60] sm:$0xff]
        %v1007 = vld [vmem:[%s666 + $0x68] sm:$0xff]
        %v1008 = vld [vmem:[%s666 + $0x70] sm:$0xff]
        %v1009 = vld [vmem:[%s666 + $0x78] sm:$0xff]
        %v1010 = vld [vmem:[%s770] sm:$0x1]
        %1011 = vst [vmem:[#allocation2] sm:$0xff] %v793
        %1012 = vst [vmem:[#allocation2 + $0x10] sm:$0xff] %v794
        %1013 = vst [vmem:[#allocation2 + $0x8] sm:$0xff] 0.0
        %1014 = vst [vmem:[#allocation2 + $0x18] sm:$0xff] 0.0
        %v1015 = vld [vmem:[%s0] sm:$0xff]
        %v1016 = vld [vmem:[%s0 + $0x8] sm:$0xff]
        %v1017 = vld [vmem:[%s0 + $0x10] sm:$0xff]
        %v1018 = vld [vmem:[%s0 + $0x18] sm:$0xff]
        %v1019 = vld [vmem:[%s1] sm:$0xff]
        %v1020 = vld [vmem:[%s1 + $0x8] sm:$0xff]
        %v1021 = vld [vmem:[%s1 + $0x10] sm:$0xff]
        %v1022 = vld [vmem:[%s1 + $0x18] sm:$0xff]
        %v1023 = vld [vmem:[#allocation15] sm:$0xff]
        %v1024 = vld [vmem:[#allocation15 + $0x8] sm:$0xff]
        %v1025 = vld [vmem:[#allocation15 + $0x10] sm:$0xff]
        %v1026 = vld [vmem:[#allocation15 + $0x18] sm:$0xff]
        %v1027 = vlaneseq
        %v1028 = vand.u32 %v1027, 127
        %1029 = vset.pattern.permute.xlu0 0
        %1030 = vperm.xlu0 %1029, %v1015
        %v1031 = vpop.permute.xlu0 %1030
        %1032 = vset.pattern.permute.xlu0 0
        %1033 = vperm.xlu0 %1032, %v1016
        %v1034 = vpop.permute.xlu0 %1033
        %1035 = vset.pattern.permute.xlu0 0
        %1036 = vperm.xlu0 %1035, %v1017
        %v1037 = vpop.permute.xlu0 %1036
        %1038 = vset.pattern.permute.xlu0 0
        %1039 = vperm.xlu0 %1038, %v1018
        %v1040 = vpop.permute.xlu0 %1039
        %vm1041 = vcmp.eq.s32.totalorder %v1031, %v1028
        %vm1042 = vcmp.eq.s32.totalorder %v1034, %v1028
        %vm1043 = vcmp.eq.s32.totalorder %v1037, %v1028
        %vm1044 = vcmp.eq.s32.totalorder %v1040, %v1028
        %v1045 = vsel %vm1041, 1, 0
        %v1046 = vsel %vm1042, 1, 0
        %v1047 = vsel %vm1043, 1, 0
        %v1048 = vsel %vm1044, 1, 0
        %v1049 = vcvt.s32.f32 %v1045
        %v1050 = vcvt.s32.f32 %v1046
        %v1051 = vcvt.s32.f32 %v1047
        %v1052 = vcvt.s32.f32 %v1048
        %1053 = vset.pattern.permute.xlu0 0
        %1054 = vperm.xlu0 %1053, %v1019
        %v1055 = vpop.permute.xlu0 %1054
        %1056 = vset.pattern.permute.xlu0 0
        %1057 = vperm.xlu0 %1056, %v1020
        %v1058 = vpop.permute.xlu0 %1057
        %1059 = vset.pattern.permute.xlu0 0
        %1060 = vperm.xlu0 %1059, %v1021
        %v1061 = vpop.permute.xlu0 %1060
        %1062 = vset.pattern.permute.xlu0 0
        %1063 = vperm.xlu0 %1062, %v1022
        %v1064 = vpop.permute.xlu0 %1063
        %vm1065 = vcmp.eq.s32.totalorder %v1055, %v1028
        %vm1066 = vcmp.eq.s32.totalorder %v1058, %v1028
        %vm1067 = vcmp.eq.s32.totalorder %v1061, %v1028
        %vm1068 = vcmp.eq.s32.totalorder %v1064, %v1028
        %v1069 = vsel %vm1065, 1, 0
        %v1070 = vsel %vm1066, 1, 0
        %v1071 = vsel %vm1067, 1, 0
        %v1072 = vsel %vm1068, 1, 0
        %v1073 = vcvt.s32.f32 %v1069
        %v1074 = vcvt.s32.f32 %v1070
        %v1075 = vcvt.s32.f32 %v1071
        %v1076 = vcvt.s32.f32 %v1072
        %vm1077 = vcmask 130048
        %v1079 = vsel %vm1077, %v1073, 0
        %v1082 = vsel %vm1077, %v1074, 0
        %v1085 = vsel %vm1077, %v1075, 0
        %v1088 = vsel %vm1077, %v1076, 0
        %1090 = vmatprep.subr.mxu0 0.0
        %1091 = vmatpush1.msra.mxu0 0.0
        %1092 = vmatprep.subr.mxu0 0.0
        %1093 = vmatpush1.msra.mxu0 0.0
        %1094 = vmatprep.subr.mxu0 0.0
        %1095 = vmatpush1.msra.mxu0 0.0
        %1096 = vmatprep.subr.mxu0 0.0
        %1097 = vmatpush1.msra.mxu0 0.0
        %1098 = vmatprep.subr.mxu0 0.0
        %1099 = vmatpush1.msra.mxu0 0.0
        %1100 = vmatprep.subr.mxu0 0.0
        %1101 = vmatpush1.msra.mxu0 0.0
        %1102 = vmatprep.subr.mxu0 0.0
        %1103 = vmatpush1.msra.mxu0 0.0
        %1104 = vmatprep.subr.mxu0 0.0
        %1105 = vmatpush1.msra.mxu0 0.0
        %1106 = vmatprep.subr.mxu0 0.0
        %1107 = vmatpush1.msra.mxu0 0.0
        %1108 = vmatprep.subr.mxu0 0.0
        %1109 = vmatpush1.msra.mxu0 0.0
        %1110 = vmatprep.subr.mxu0 0.0
        %1111 = vmatpush1.msra.mxu0 0.0
        %1112 = vmatprep.subr.mxu0 0.0
        %1113 = vmatpush1.msra.mxu0 0.0
        %1114 = vmatprep.subr.mxu0 0.0
        %1115 = vmatpush1.msra.mxu0 0.0
        %1116 = vmatprep.subr.mxu0 0.0
        %1117 = vmatpush1.msra.mxu0 0.0
        %1118 = vmatprep.subr.mxu0 0.0
        %1119 = vmatpush1.msra.mxu0 %v974
        %1120 = vmatprep.subr.mxu0 0.0
        %1121 = vmatpush1.msra.mxu0 %v969
        %1122 = vmatprep.subr.mxu0 0.0
        %1123 = vmatpush2.msra.mxu0 0.0
        %1124 = vmatprep.subr.mxu0 0.0
        %1125 = vmatpush2.msra.mxu0 0.0
        %1126 = vmatprep.subr.mxu0 0.0
        %1127 = vmatpush2.msra.mxu0 0.0
        %1128 = vmatprep.subr.mxu0 0.0
        %1129 = vmatpush2.msra.mxu0 0.0
        %1130 = vmatprep.subr.mxu0 0.0
        %1131 = vmatpush2.msra.mxu0 0.0
        %1132 = vmatprep.subr.mxu0 0.0
        %1133 = vmatpush2.msra.mxu0 0.0
        %1134 = vmatprep.subr.mxu0 0.0
        %1135 = vmatpush2.msra.mxu0 0.0
        %1136 = vmatprep.subr.mxu0 0.0
        %1137 = vmatpush2.msra.mxu0 0.0
        %1138 = vmatprep.subr.mxu0 0.0
        %1139 = vmatpush2.msra.mxu0 0.0
        %1140 = vmatprep.subr.mxu0 0.0
        %1141 = vmatpush2.msra.mxu0 0.0
        %1142 = vmatprep.subr.mxu0 0.0
        %1143 = vmatpush2.msra.mxu0 0.0
        %1144 = vmatprep.subr.mxu0 0.0
        %1145 = vmatpush2.msra.mxu0 0.0
        %1146 = vmatprep.subr.mxu0 0.0
        %1147 = vmatpush2.msra.mxu0 0.0
        %1148 = vmatprep.subr.mxu0 0.0
        %1149 = vmatpush2.msra.mxu0 0.0
        %1150 = vmatprep.subr.mxu0 0.0
        %1151 = vmatpush2.msra.mxu0 0.0
        %1152 = vmatprep.subr.mxu0 0.0
        %1153 = vmatpush2.msra.mxu0 0.0
        %1154 = vmatprep.mubr.f32.mxu0 0.0
        %1155 = vmatmul.mubr.f32.gmra.mxu0 %v1079
        %v1156 = vpop.f32.mrf.mxu0
        %v1157 = vadd.f32 0.0, %v1156
        %v1158 = vpop.f32.mrf.mxu0
        %1159 = vmatprep.mubr.f32.mxu0 0.0
        %1160 = vmatmul.mubr.f32.gmra.mxu0 %v1082
        %v1161 = vpop.f32.mrf.mxu0
        %v1162 = vadd.f32 0.0, %v1161
        %v1163 = vpop.f32.mrf.mxu0
        %1164 = vmatprep.mubr.f32.mxu0 0.0
        %1165 = vmatmul.mubr.f32.gmra.mxu0 %v1085
        %v1166 = vpop.f32.mrf.mxu0
        %v1167 = vadd.f32 0.0, %v1166
        %v1168 = vpop.f32.mrf.mxu0
        %1169 = vmatprep.mubr.f32.mxu0 0.0
        %1170 = vmatmul.mubr.f32.gmra.mxu0 %v1088
        %v1171 = vpop.f32.mrf.mxu0
        %v1172 = vadd.f32 0.0, %v1171
        %v1173 = vpop.f32.mrf.mxu0
        %1174 = vdwg.mxu0
        %v1176 = vsel %vm1077, %v1049, 0
        %v1179 = vsel %vm1077, %v1050, 0
        %v1182 = vsel %vm1077, %v1051, 0
        %v1185 = vsel %vm1077, %v1052, 0
        %1187 = vmatprep.subr.mxu0 0.0
        %1188 = vmatpush1.msra.mxu0 0.0
        %1189 = vmatprep.subr.mxu0 0.0
        %1190 = vmatpush1.msra.mxu0 0.0
        %1191 = vmatprep.subr.mxu0 0.0
        %1192 = vmatpush1.msra.mxu0 0.0
        %1193 = vmatprep.subr.mxu0 0.0
        %1194 = vmatpush1.msra.mxu0 0.0
        %1195 = vmatprep.subr.mxu0 0.0
        %1196 = vmatpush1.msra.mxu0 0.0
        %1197 = vmatprep.subr.mxu0 0.0
        %1198 = vmatpush1.msra.mxu0 0.0
        %1199 = vmatprep.subr.mxu0 0.0
        %1200 = vmatpush1.msra.mxu0 0.0
        %1201 = vmatprep.subr.mxu0 0.0
        %1202 = vmatpush1.msra.mxu0 0.0
        %1203 = vmatprep.subr.mxu0 0.0
        %1204 = vmatpush1.msra.mxu0 0.0
        %1205 = vmatprep.subr.mxu0 0.0
        %1206 = vmatpush1.msra.mxu0 0.0
        %1207 = vmatprep.subr.mxu0 0.0
        %1208 = vmatpush1.msra.mxu0 0.0
        %1209 = vmatprep.subr.mxu0 0.0
        %1210 = vmatpush1.msra.mxu0 0.0
        %1211 = vmatprep.subr.mxu0 0.0
        %1212 = vmatpush1.msra.mxu0 0.0
        %1213 = vmatprep.subr.mxu0 0.0
        %1214 = vmatpush1.msra.mxu0 0.0
        %1215 = vmatprep.subr.mxu0 0.0
        %1216 = vmatpush1.msra.mxu0 %v883
        %1217 = vmatprep.subr.mxu0 0.0
        %1218 = vmatpush1.msra.mxu0 %v878
        %1219 = vmatprep.subr.mxu0 0.0
        %1220 = vmatpush2.msra.mxu0 0.0
        %1221 = vmatprep.subr.mxu0 0.0
        %1222 = vmatpush2.msra.mxu0 0.0
        %1223 = vmatprep.subr.mxu0 0.0
        %1224 = vmatpush2.msra.mxu0 0.0
        %1225 = vmatprep.subr.mxu0 0.0
        %1226 = vmatpush2.msra.mxu0 0.0
        %1227 = vmatprep.subr.mxu0 0.0
        %1228 = vmatpush2.msra.mxu0 0.0
        %1229 = vmatprep.subr.mxu0 0.0
        %1230 = vmatpush2.msra.mxu0 0.0
        %1231 = vmatprep.subr.mxu0 0.0
        %1232 = vmatpush2.msra.mxu0 0.0
        %1233 = vmatprep.subr.mxu0 0.0
        %1234 = vmatpush2.msra.mxu0 0.0
        %1235 = vmatprep.subr.mxu0 0.0
        %1236 = vmatpush2.msra.mxu0 0.0
        %1237 = vmatprep.subr.mxu0 0.0
        %1238 = vmatpush2.msra.mxu0 0.0
        %1239 = vmatprep.subr.mxu0 0.0
        %1240 = vmatpush2.msra.mxu0 0.0
        %1241 = vmatprep.subr.mxu0 0.0
        %1242 = vmatpush2.msra.mxu0 0.0
        %1243 = vmatprep.subr.mxu0 0.0
        %1244 = vmatpush2.msra.mxu0 0.0
        %1245 = vmatprep.subr.mxu0 0.0
        %1246 = vmatpush2.msra.mxu0 0.0
        %1247 = vmatprep.subr.mxu0 0.0
        %1248 = vmatpush2.msra.mxu0 0.0
        %1249 = vmatprep.subr.mxu0 0.0
        %1250 = vmatpush2.msra.mxu0 0.0
        %1251 = vmatprep.mubr.f32.mxu0 0.0
        %1252 = vmatmul.mubr.f32.gmra.mxu0 %v1176
        %v1253 = vpop.f32.mrf.mxu0
        %v1254 = vadd.f32 %v1157, %v1253
        %v1255 = vpop.f32.mrf.mxu0
        %1256 = vmatprep.mubr.f32.mxu0 0.0
        %1257 = vmatmul.mubr.f32.gmra.mxu0 %v1179
        %v1258 = vpop.f32.mrf.mxu0
        %v1259 = vadd.f32 %v1162, %v1258
        %v1260 = vpop.f32.mrf.mxu0
        %1261 = vmatprep.mubr.f32.mxu0 0.0
        %1262 = vmatmul.mubr.f32.gmra.mxu0 %v1182
        %v1263 = vpop.f32.mrf.mxu0
        %v1264 = vadd.f32 %v1167, %v1263
        %v1265 = vpop.f32.mrf.mxu0
        %1266 = vmatprep.mubr.f32.mxu0 0.0
        %1267 = vmatmul.mubr.f32.gmra.mxu0 %v1185
        %v1268 = vpop.f32.mrf.mxu0
        %v1269 = vadd.f32 %v1172, %v1268
        %v1270 = vpop.f32.mrf.mxu0
        %1271 = vdwg.mxu0
        %1272 = vmatprep.subr.mxu0 0.0
        %1273 = vmatpush1.msra.mxu0 %v992
        %1274 = vmatprep.subr.mxu0 0.0
        %1275 = vmatpush1.msra.mxu0 %v991
        %1276 = vmatprep.subr.mxu0 0.0
        %1277 = vmatpush1.msra.mxu0 %v990
        %1278 = vmatprep.subr.mxu0 0.0
        %1279 = vmatpush1.msra.mxu0 %v989
        %1280 = vmatprep.subr.mxu0 0.0
        %1281 = vmatpush1.msra.mxu0 %v988
        %1282 = vmatprep.subr.mxu0 0.0
        %1283 = vmatpush1.msra.mxu0 %v987
        %1284 = vmatprep.subr.mxu0 0.0
        %1285 = vmatpush1.msra.mxu0 %v986
        %1286 = vmatprep.subr.mxu0 0.0
        %1287 = vmatpush1.msra.mxu0 %v985
        %1288 = vmatprep.subr.mxu0 0.0
        %1289 = vmatpush1.msra.mxu0 %v984
        %1290 = vmatprep.subr.mxu0 0.0
        %1291 = vmatpush1.msra.mxu0 %v983
        %1292 = vmatprep.subr.mxu0 0.0
        %1293 = vmatpush1.msra.mxu0 %v982
        %1294 = vmatprep.subr.mxu0 0.0
        %1295 = vmatpush1.msra.mxu0 %v981
        %1296 = vmatprep.subr.mxu0 0.0
        %1297 = vmatpush1.msra.mxu0 %v980
        %1298 = vmatprep.subr.mxu0 0.0
        %1299 = vmatpush1.msra.mxu0 %v979
        %1300 = vmatprep.subr.mxu0 0.0
        %1301 = vmatpush1.msra.mxu0 %v978
        %1302 = vmatprep.subr.mxu0 0.0
        %1303 = vmatpush1.msra.mxu0 %v977
        %1304 = vmatprep.subr.mxu0 0.0
        %1305 = vmatpush2.msra.mxu0 0.0
        %1306 = vmatprep.subr.mxu0 0.0
        %1307 = vmatpush2.msra.mxu0 0.0
        %1308 = vmatprep.subr.mxu0 0.0
        %1309 = vmatpush2.msra.mxu0 0.0
        %1310 = vmatprep.subr.mxu0 0.0
        %1311 = vmatpush2.msra.mxu0 0.0
        %1312 = vmatprep.subr.mxu0 0.0
        %1313 = vmatpush2.msra.mxu0 0.0
        %1314 = vmatprep.subr.mxu0 0.0
        %1315 = vmatpush2.msra.mxu0 0.0
        %1316 = vmatprep.subr.mxu0 0.0
        %1317 = vmatpush2.msra.mxu0 0.0
        %1318 = vmatprep.subr.mxu0 0.0
        %1319 = vmatpush2.msra.mxu0 0.0
        %1320 = vmatprep.subr.mxu0 0.0
        %1321 = vmatpush2.msra.mxu0 0.0
        %1322 = vmatprep.subr.mxu0 0.0
        %1323 = vmatpush2.msra.mxu0 0.0
        %1324 = vmatprep.subr.mxu0 0.0
        %1325 = vmatpush2.msra.mxu0 0.0
        %1326 = vmatprep.subr.mxu0 0.0
        %1327 = vmatpush2.msra.mxu0 0.0
        %1328 = vmatprep.subr.mxu0 0.0
        %1329 = vmatpush2.msra.mxu0 0.0
        %1330 = vmatprep.subr.mxu0 0.0
        %1331 = vmatpush2.msra.mxu0 0.0
        %1332 = vmatprep.subr.mxu0 0.0
        %1333 = vmatpush2.msra.mxu0 0.0
        %1334 = vmatprep.subr.mxu0 0.0
        %1335 = vmatpush2.msra.mxu0 0.0
        %1336 = vmatprep.mubr.f32.mxu0 0.0
        %1337 = vmatmul.mubr.f32.gmra.mxu0 %v1023
        %v1338 = vpop.f32.mrf.mxu0
        %v1339 = vadd.f32 0.0, %v1338
        %v1340 = vpop.f32.mrf.mxu0
        %1341 = vmatprep.mubr.f32.mxu0 0.0
        %1342 = vmatmul.mubr.f32.gmra.mxu0 %v1024
        %v1343 = vpop.f32.mrf.mxu0
        %v1344 = vadd.f32 0.0, %v1343
        %v1345 = vpop.f32.mrf.mxu0
        %1346 = vmatprep.mubr.f32.mxu0 0.0
        %1347 = vmatmul.mubr.f32.gmra.mxu0 %v1025
        %v1348 = vpop.f32.mrf.mxu0
        %v1349 = vadd.f32 0.0, %v1348
        %v1350 = vpop.f32.mrf.mxu0
        %1351 = vmatprep.mubr.f32.mxu0 0.0
        %1352 = vmatmul.mubr.f32.gmra.mxu0 %v1026
        %v1353 = vpop.f32.mrf.mxu0
        %v1354 = vadd.f32 0.0, %v1353
        %v1355 = vpop.f32.mrf.mxu0
        %1356 = vdwg.mxu0
        %v1357 = vadd.f32 %v1254, %v1339
        %v1358 = vadd.f32 %v1259, %v1344
        %v1359 = vadd.f32 %v1264, %v1349
        %v1360 = vadd.f32 %v1269, %v1354
        %v1362 = vlaneseq
        %v1363 = vshrl.u32 %v1362, 7
        %v1364 = vsub.s32 0, %v1363
        %v1365 = vrot.slane %v993, %v1364
        %v1367 = vadd.f32 %v1357, %v1365
        %v1368 = vadd.f32 %v1358, %v1365
        %v1369 = vadd.f32 %v1359, %v1365
        %v1370 = vadd.f32 %v1360, %v1365
        %v1371 = vmax.f32 %v1367, 0.0
        %v1372 = vmax.f32 %v1368, 0.0
        %v1373 = vmax.f32 %v1369, 0.0
        %v1374 = vmax.f32 %v1370, 0.0
        %v1376 = vlaneseq
        %v1377 = vshrl.u32 %v1376, 7
        %v1378 = vsub.s32 0, %v1377
        %v1379 = vrot.slane %v1010, %v1378
        %1381 = vmatprep.subr.mxu0 0.0
        %1382 = vmatpush1.msra.mxu0 %v1009
        %1383 = vmatprep.subr.mxu0 0.0
        %1384 = vmatpush1.msra.mxu0 %v1008
        %1385 = vmatprep.subr.mxu0 0.0
        %1386 = vmatpush1.msra.mxu0 %v1007
        %1387 = vmatprep.subr.mxu0 0.0
        %1388 = vmatpush1.msra.mxu0 %v1006
        %1389 = vmatprep.subr.mxu0 0.0
        %1390 = vmatpush1.msra.mxu0 %v1005
        %1391 = vmatprep.subr.mxu0 0.0
        %1392 = vmatpush1.msra.mxu0 %v1004
        %1393 = vmatprep.subr.mxu0 0.0
        %1394 = vmatpush1.msra.mxu0 %v1003
        %1395 = vmatprep.subr.mxu0 0.0
        %1396 = vmatpush1.msra.mxu0 %v1002
        %1397 = vmatprep.subr.mxu0 0.0
        %1398 = vmatpush1.msra.mxu0 %v1001
        %1399 = vmatprep.subr.mxu0 0.0
        %1400 = vmatpush1.msra.mxu0 %v1000
        %1401 = vmatprep.subr.mxu0 0.0
        %1402 = vmatpush1.msra.mxu0 %v999
        %1403 = vmatprep.subr.mxu0 0.0
        %1404 = vmatpush1.msra.mxu0 %v998
        %1405 = vmatprep.subr.mxu0 0.0
        %1406 = vmatpush1.msra.mxu0 %v997
        %1407 = vmatprep.subr.mxu0 0.0
        %1408 = vmatpush1.msra.mxu0 %v996
        %1409 = vmatprep.subr.mxu0 0.0
        %1410 = vmatpush1.msra.mxu0 %v995
        %1411 = vmatprep.subr.mxu0 0.0
        %1412 = vmatpush1.msra.mxu0 %v994
        %1413 = vmatprep.subr.mxu0 0.0
        %1414 = vmatpush2.msra.mxu0 0.0
        %1415 = vmatprep.subr.mxu0 0.0
        %1416 = vmatpush2.msra.mxu0 0.0
        %1417 = vmatprep.subr.mxu0 0.0
        %1418 = vmatpush2.msra.mxu0 0.0
        %1419 = vmatprep.subr.mxu0 0.0
        %1420 = vmatpush2.msra.mxu0 0.0
        %1421 = vmatprep.subr.mxu0 0.0
        %1422 = vmatpush2.msra.mxu0 0.0
        %1423 = vmatprep.subr.mxu0 0.0
        %1424 = vmatpush2.msra.mxu0 0.0
        %1425 = vmatprep.subr.mxu0 0.0
        %1426 = vmatpush2.msra.mxu0 0.0
        %1427 = vmatprep.subr.mxu0 0.0
        %1428 = vmatpush2.msra.mxu0 0.0
        %1429 = vmatprep.subr.mxu0 0.0
        %1430 = vmatpush2.msra.mxu0 0.0
        %1431 = vmatprep.subr.mxu0 0.0
        %1432 = vmatpush2.msra.mxu0 0.0
        %1433 = vmatprep.subr.mxu0 0.0
        %1434 = vmatpush2.msra.mxu0 0.0
        %1435 = vmatprep.subr.mxu0 0.0
        %1436 = vmatpush2.msra.mxu0 0.0
        %1437 = vmatprep.subr.mxu0 0.0
        %1438 = vmatpush2.msra.mxu0 0.0
        %1439 = vmatprep.subr.mxu0 0.0
        %1440 = vmatpush2.msra.mxu0 0.0
        %1441 = vmatprep.subr.mxu0 0.0
        %1442 = vmatpush2.msra.mxu0 0.0
        %1443 = vmatprep.subr.mxu0 0.0
        %1444 = vmatpush2.msra.mxu0 0.0
        %1445 = vmatprep.mubr.f32.mxu0 0.0
        %1446 = vmatmul.mubr.f32.gmra.mxu0 %v1371
        %v1447 = vpop.f32.mrf.mxu0
        %v1448 = vadd.f32 %v1379, %v1447
        %v1449 = vpop.f32.mrf.mxu0
        %1450 = vmatprep.mubr.f32.mxu0 0.0
        %1451 = vmatmul.mubr.f32.gmra.mxu0 %v1372
        %v1452 = vpop.f32.mrf.mxu0
        %v1453 = vadd.f32 %v1379, %v1452
        %v1454 = vpop.f32.mrf.mxu0
        %1455 = vmatprep.mubr.f32.mxu0 0.0
        %1456 = vmatmul.mubr.f32.gmra.mxu0 %v1373
        %v1457 = vpop.f32.mrf.mxu0
        %v1458 = vadd.f32 %v1379, %v1457
        %v1459 = vpop.f32.mrf.mxu0
        %1460 = vmatprep.mubr.f32.mxu0 0.0
        %1461 = vmatmul.mubr.f32.gmra.mxu0 %v1374
        %v1462 = vpop.f32.mrf.mxu0
        %v1463 = vadd.f32 %v1379, %v1462
        %v1464 = vpop.f32.mrf.mxu0
        %1465 = vdwg.mxu0
        %v1466 = vadd.f32 %v1448, %v1023
        %v1467 = vadd.f32 %v1453, %v1024
        %v1468 = vadd.f32 %v1458, %v1025
        %v1469 = vadd.f32 %v1463, %v1026
        %1470 = vst [vmem:[#allocation15] sm:$0xff] %v1466
        %1471 = vst [vmem:[#allocation15 + $0x8] sm:$0xff] %v1467
        %1472 = vst [vmem:[#allocation15 + $0x10] sm:$0xff] %v1468
        %1473 = vst [vmem:[#allocation15 + $0x18] sm:$0xff] %v1469
        %v1474 = vld [vmem:[%s2] sm:$0x1]
        %v1475 = vlaneseq
        %v1476 = vshrl.u32 %v1475, 7
        %v1477 = vadd.s32 %v1476, 8
        %v1478 = vlaneseq
        %v1479 = vshrl.u32 %v1478, 7
        %v1480 = vsub.s32 0, %v1479
        %v1481 = vrot.slane %v1474, %v1480
        %vm1482 = vcmp.eq.s32.totalorder %v1476, %v1481
        %vm1483 = vcmp.eq.s32.totalorder %v1477, %v1481
        %v1484 = vsel %vm1482, 1, 0
        %v1485 = vsel %vm1483, 1, 0
        %v1486 = vcvt.s32.f32 %v1484
        %v1487 = vcvt.s32.f32 %v1485
        %v1488 = vld [vmem:[#allocation2 + $0x8] sm:$0xff]
        %v1489 = vld [vmem:[#allocation2 + $0x18] sm:$0xff]
        %vm1490 = vcmask 261120
        %v1492 = vsel %vm1490, %v1486, 0
        %v1495 = vsel %vm1490, %v1487, 0
        %1497 = vmatprep.subr.mxu0 0.0
        %1498 = vmatpush1.msra.mxu0 0.0
        %1499 = vmatprep.subr.mxu0 0.0
        %1500 = vmatpush1.msra.mxu0 0.0
        %1501 = vmatprep.subr.mxu0 0.0
        %1502 = vmatpush1.msra.mxu0 0.0
        %1503 = vmatprep.subr.mxu0 0.0
        %1504 = vmatpush1.msra.mxu0 0.0
        %1505 = vmatprep.subr.mxu0 0.0
        %1506 = vmatpush1.msra.mxu0 0.0
        %1507 = vmatprep.subr.mxu0 0.0
        %1508 = vmatpush1.msra.mxu0 0.0
        %1509 = vmatprep.subr.mxu0 0.0
        %1510 = vmatpush1.msra.mxu0 0.0
        %1511 = vmatprep.subr.mxu0 0.0
        %1512 = vmatpush1.msra.mxu0 0.0
        %1513 = vmatprep.subr.mxu0 0.0
        %1514 = vmatpush1.msra.mxu0 0.0
        %1515 = vmatprep.subr.mxu0 0.0
        %1516 = vmatpush1.msra.mxu0 0.0
        %1517 = vmatprep.subr.mxu0 0.0
        %1518 = vmatpush1.msra.mxu0 0.0
        %1519 = vmatprep.subr.mxu0 0.0
        %1520 = vmatpush1.msra.mxu0 0.0
        %1521 = vmatprep.subr.mxu0 0.0
        %1522 = vmatpush1.msra.mxu0 %v1463
        %1523 = vmatprep.subr.mxu0 0.0
        %1524 = vmatpush1.msra.mxu0 %v1458
        %1525 = vmatprep.subr.mxu0 0.0
        %1526 = vmatpush1.msra.mxu0 %v1453
        %1527 = vmatprep.subr.mxu0 0.0
        %1528 = vmatpush1.msra.mxu0 %v1448
        %1529 = vmatprep.subr.mxu0 0.0
        %1530 = vmatpush2.msra.mxu0 0.0
        %1531 = vmatprep.subr.mxu0 0.0
        %1532 = vmatpush2.msra.mxu0 0.0
        %1533 = vmatprep.subr.mxu0 0.0
        %1534 = vmatpush2.msra.mxu0 0.0
        %1535 = vmatprep.subr.mxu0 0.0
        %1536 = vmatpush2.msra.mxu0 0.0
        %1537 = vmatprep.subr.mxu0 0.0
        %1538 = vmatpush2.msra.mxu0 0.0
        %1539 = vmatprep.subr.mxu0 0.0
        %1540 = vmatpush2.msra.mxu0 0.0
        %1541 = vmatprep.subr.mxu0 0.0
        %1542 = vmatpush2.msra.mxu0 0.0
        %1543 = vmatprep.subr.mxu0 0.0
        %1544 = vmatpush2.msra.mxu0 0.0
        %1545 = vmatprep.subr.mxu0 0.0
        %1546 = vmatpush2.msra.mxu0 0.0
        %1547 = vmatprep.subr.mxu0 0.0
        %1548 = vmatpush2.msra.mxu0 0.0
        %1549 = vmatprep.subr.mxu0 0.0
        %1550 = vmatpush2.msra.mxu0 0.0
        %1551 = vmatprep.subr.mxu0 0.0
        %1552 = vmatpush2.msra.mxu0 0.0
        %1553 = vmatprep.subr.mxu0 0.0
        %1554 = vmatpush2.msra.mxu0 0.0
        %1555 = vmatprep.subr.mxu0 0.0
        %1556 = vmatpush2.msra.mxu0 0.0
        %1557 = vmatprep.subr.mxu0 0.0
        %1558 = vmatpush2.msra.mxu0 0.0
        %1559 = vmatprep.subr.mxu0 0.0
        %1560 = vmatpush2.msra.mxu0 0.0
        %1561 = vmatprep.mubr.f32.mxu0 0.0
        %1562 = vmatmul.mubr.f32.gmra.mxu0 %v1492
        %v1563 = vpop.f32.mrf.mxu0
        %v1564 = vadd.f32 0.0, %v1563
        %v1565 = vpop.f32.mrf.mxu0
        %1566 = vmatprep.mubr.f32.mxu0 0.0
        %1567 = vmatmul.mubr.f32.gmra.mxu0 %v1495
        %v1568 = vpop.f32.mrf.mxu0
        %v1569 = vadd.f32 0.0, %v1568
        %v1570 = vpop.f32.mrf.mxu0
        %1571 = vdwg.mxu0
        %v1572 = vadd.f32 %v1488, %v1564
        %v1573 = vadd.f32 %v1489, %v1569
        %1574 = vst [vmem:[#allocation2 + $0x8] sm:$0xff] %v1572
        %1575 = vst [vmem:[#allocation2 + $0x18] sm:$0xff] %v1573
        %v1576 = vld [vmem:[#allocation2] sm:$0xff]
        %v1577 = vld [vmem:[#allocation2 + $0x8] sm:$0xff]
        %v1578 = vld [vmem:[#allocation2 + $0x10] sm:$0xff]
        %v1579 = vld [vmem:[#allocation2 + $0x18] sm:$0xff]
        %v1580 = vld [vmem:[%s675] sm:$0xff]
        %v1581 = vld [vmem:[%s675 + $0x8] sm:$0xff]
        %v1582 = vld [vmem:[%s675 + $0x10] sm:$0xff]
        %v1583 = vld [vmem:[%s675 + $0x18] sm:$0xff]
        %v1584 = vld [vmem:[%s675 + $0x20] sm:$0xff]
        %v1585 = vld [vmem:[%s675 + $0x28] sm:$0xff]
        %v1586 = vld [vmem:[%s675 + $0x30] sm:$0xff]
        %v1587 = vld [vmem:[%s675 + $0x38] sm:$0xff]
        %v1588 = vld [vmem:[%s675 + $0x40] sm:$0xff]
        %v1589 = vld [vmem:[%s675 + $0x48] sm:$0xff]
        %v1590 = vld [vmem:[%s675 + $0x50] sm:$0xff]
        %v1591 = vld [vmem:[%s675 + $0x58] sm:$0xff]
        %v1592 = vld [vmem:[%s675 + $0x60] sm:$0xff]
        %v1593 = vld [vmem:[%s675 + $0x68] sm:$0xff]
        %v1594 = vld [vmem:[%s675 + $0x70] sm:$0xff]
        %v1595 = vld [vmem:[%s675 + $0x78] sm:$0xff]
        %v1596 = vld [vmem:[%s675 + $0x80] sm:$0xff]
        %v1597 = vld [vmem:[%s675 + $0x88] sm:$0xff]
        %v1598 = vld [vmem:[%s675 + $0x90] sm:$0xff]
        %v1599 = vld [vmem:[%s675 + $0x98] sm:$0xff]
        %v1600 = vld [vmem:[%s675 + $0xa0] sm:$0xff]
        %v1601 = vld [vmem:[%s675 + $0xa8] sm:$0xff]
        %v1602 = vld [vmem:[%s675 + $0xb0] sm:$0xff]
        %v1603 = vld [vmem:[%s675 + $0xb8] sm:$0xff]
        %v1604 = vld [vmem:[%s675 + $0xc0] sm:$0xff]
        %v1605 = vld [vmem:[%s675 + $0xc8] sm:$0xff]
        %v1606 = vld [vmem:[%s675 + $0xd0] sm:$0xff]
        %v1607 = vld [vmem:[%s675 + $0xd8] sm:$0xff]
        %v1608 = vld [vmem:[%s675 + $0xe0] sm:$0xff]
        %v1609 = vld [vmem:[%s675 + $0xe8] sm:$0xff]
        %v1610 = vld [vmem:[%s675 + $0xf0] sm:$0xff]
        %v1611 = vld [vmem:[%s675 + $0xf8] sm:$0xff]
        %v1612 = vld [vmem:[%s773] sm:$0x1]
        %v1614 = vlaneseq
        %v1615 = vshrl.u32 %v1614, 7
        %v1616 = vsub.s32 0, %v1615
        %v1617 = vrot.slane %v1612, %v1616
        %1619 = vmatprep.subr.mxu0 0.0
        %1620 = vmatpush1.msra.mxu0 %v1595
        %1621 = vmatprep.subr.mxu0 0.0
        %1622 = vmatpush1.msra.mxu0 %v1594
        %1623 = vmatprep.subr.mxu0 0.0
        %1624 = vmatpush1.msra.mxu0 %v1593
        %1625 = vmatprep.subr.mxu0 0.0
        %1626 = vmatpush1.msra.mxu0 %v1592
        %1627 = vmatprep.subr.mxu0 0.0
        %1628 = vmatpush1.msra.mxu0 %v1591
        %1629 = vmatprep.subr.mxu0 0.0
        %1630 = vmatpush1.msra.mxu0 %v1590
        %1631 = vmatprep.subr.mxu0 0.0
        %1632 = vmatpush1.msra.mxu0 %v1589
        %1633 = vmatprep.subr.mxu0 0.0
        %1634 = vmatpush1.msra.mxu0 %v1588
        %1635 = vmatprep.subr.mxu0 0.0
        %1636 = vmatpush1.msra.mxu0 %v1587
        %1637 = vmatprep.subr.mxu0 0.0
        %1638 = vmatpush1.msra.mxu0 %v1586
        %1639 = vmatprep.subr.mxu0 0.0
        %1640 = vmatpush1.msra.mxu0 %v1585
        %1641 = vmatprep.subr.mxu0 0.0
        %1642 = vmatpush1.msra.mxu0 %v1584
        %1643 = vmatprep.subr.mxu0 0.0
        %1644 = vmatpush1.msra.mxu0 %v1583
        %1645 = vmatprep.subr.mxu0 0.0
        %1646 = vmatpush1.msra.mxu0 %v1582
        %1647 = vmatprep.subr.mxu0 0.0
        %1648 = vmatpush1.msra.mxu0 %v1581
        %1649 = vmatprep.subr.mxu0 0.0
        %1650 = vmatpush1.msra.mxu0 %v1580
        %1651 = vmatprep.subr.mxu0 0.0
        %1652 = vmatpush2.msra.mxu0 %v1611
        %1653 = vmatprep.subr.mxu0 0.0
        %1654 = vmatpush2.msra.mxu0 %v1610
        %1655 = vmatprep.subr.mxu0 0.0
        %1656 = vmatpush2.msra.mxu0 %v1609
        %1657 = vmatprep.subr.mxu0 0.0
        %1658 = vmatpush2.msra.mxu0 %v1608
        %1659 = vmatprep.subr.mxu0 0.0
        %1660 = vmatpush2.msra.mxu0 %v1607
        %1661 = vmatprep.subr.mxu0 0.0
        %1662 = vmatpush2.msra.mxu0 %v1606
        %1663 = vmatprep.subr.mxu0 0.0
        %1664 = vmatpush2.msra.mxu0 %v1605
        %1665 = vmatprep.subr.mxu0 0.0
        %1666 = vmatpush2.msra.mxu0 %v1604
        %1667 = vmatprep.subr.mxu0 0.0
        %1668 = vmatpush2.msra.mxu0 %v1603
        %1669 = vmatprep.subr.mxu0 0.0
        %1670 = vmatpush2.msra.mxu0 %v1602
        %1671 = vmatprep.subr.mxu0 0.0
        %1672 = vmatpush2.msra.mxu0 %v1601
        %1673 = vmatprep.subr.mxu0 0.0
        %1674 = vmatpush2.msra.mxu0 %v1600
        %1675 = vmatprep.subr.mxu0 0.0
        %1676 = vmatpush2.msra.mxu0 %v1599
        %1677 = vmatprep.subr.mxu0 0.0
        %1678 = vmatpush2.msra.mxu0 %v1598
        %1679 = vmatprep.subr.mxu0 0.0
        %1680 = vmatpush2.msra.mxu0 %v1597
        %1681 = vmatprep.subr.mxu0 0.0
        %1682 = vmatpush2.msra.mxu0 %v1596
        %1683 = vmatprep.mubr.f32.mxu0 %v1577
        %1684 = vmatmul.mubr.f32.gmra.mxu0 %v1576
        %v1685 = vpop.f32.mrf.mxu0
        %v1686 = vadd.f32 %v1617, %v1685
        %v1687 = vpop.f32.mrf.mxu0
        %1688 = vmatprep.mubr.f32.mxu0 %v1579
        %1689 = vmatmul.mubr.f32.gmra.mxu0 %v1578
        %v1690 = vpop.f32.mrf.mxu0
        %v1691 = vadd.f32 %v1617, %v1690
        %v1692 = vpop.f32.mrf.mxu0
        %1693 = vdwg.mxu0
        %v1694 = vmax.f32 %v1686, 0.0
        %v1695 = vmax.f32 %v1691, 0.0
        %v1696 = vld [vmem:[%s684] sm:$0xff]
        %v1697 = vld [vmem:[%s684 + $0x8] sm:$0xff]
        %v1698 = vld [vmem:[%s684 + $0x10] sm:$0xff]
        %v1699 = vld [vmem:[%s684 + $0x18] sm:$0xff]
        %v1700 = vld [vmem:[%s684 + $0x20] sm:$0xff]
        %v1701 = vld [vmem:[%s684 + $0x28] sm:$0xff]
        %v1702 = vld [vmem:[%s684 + $0x30] sm:$0xff]
        %v1703 = vld [vmem:[%s684 + $0x38] sm:$0xff]
        %v1704 = vld [vmem:[%s684 + $0x40] sm:$0xff]
        %v1705 = vld [vmem:[%s684 + $0x48] sm:$0xff]
        %v1706 = vld [vmem:[%s684 + $0x50] sm:$0xff]
        %v1707 = vld [vmem:[%s684 + $0x58] sm:$0xff]
        %v1708 = vld [vmem:[%s684 + $0x60] sm:$0xff]
        %v1709 = vld [vmem:[%s684 + $0x68] sm:$0xff]
        %v1710 = vld [vmem:[%s684 + $0x70] sm:$0xff]
        %v1711 = vld [vmem:[%s684 + $0x78] sm:$0xff]
        %v1712 = vld [vmem:[%s776] sm:$0x1]
        %v1714 = vlaneseq
        %v1715 = vshrl.u32 %v1714, 7
        %v1716 = vsub.s32 0, %v1715
        %v1717 = vrot.slane %v1712, %v1716
        %1719 = vmatprep.subr.mxu0 0.0
        %1720 = vmatpush1.msra.mxu0 %v1711
        %1721 = vmatprep.subr.mxu0 0.0
        %1722 = vmatpush1.msra.mxu0 %v1710
        %1723 = vmatprep.subr.mxu0 0.0
        %1724 = vmatpush1.msra.mxu0 %v1709
        %1725 = vmatprep.subr.mxu0 0.0
        %1726 = vmatpush1.msra.mxu0 %v1708
        %1727 = vmatprep.subr.mxu0 0.0
        %1728 = vmatpush1.msra.mxu0 %v1707
        %1729 = vmatprep.subr.mxu0 0.0
        %1730 = vmatpush1.msra.mxu0 %v1706
        %1731 = vmatprep.subr.mxu0 0.0
        %1732 = vmatpush1.msra.mxu0 %v1705
        %1733 = vmatprep.subr.mxu0 0.0
        %1734 = vmatpush1.msra.mxu0 %v1704
        %1735 = vmatprep.subr.mxu0 0.0
        %1736 = vmatpush1.msra.mxu0 %v1703
        %1737 = vmatprep.subr.mxu0 0.0
        %1738 = vmatpush1.msra.mxu0 %v1702
        %1739 = vmatprep.subr.mxu0 0.0
        %1740 = vmatpush1.msra.mxu0 %v1701
        %1741 = vmatprep.subr.mxu0 0.0
        %1742 = vmatpush1.msra.mxu0 %v1700
        %1743 = vmatprep.subr.mxu0 0.0
        %1744 = vmatpush1.msra.mxu0 %v1699
        %1745 = vmatprep.subr.mxu0 0.0
        %1746 = vmatpush1.msra.mxu0 %v1698
        %1747 = vmatprep.subr.mxu0 0.0
        %1748 = vmatpush1.msra.mxu0 %v1697
        %1749 = vmatprep.subr.mxu0 0.0
        %1750 = vmatpush1.msra.mxu0 %v1696
        %1751 = vmatprep.subr.mxu0 0.0
        %1752 = vmatpush2.msra.mxu0 0.0
        %1753 = vmatprep.subr.mxu0 0.0
        %1754 = vmatpush2.msra.mxu0 0.0
        %1755 = vmatprep.subr.mxu0 0.0
        %1756 = vmatpush2.msra.mxu0 0.0
        %1757 = vmatprep.subr.mxu0 0.0
        %1758 = vmatpush2.msra.mxu0 0.0
        %1759 = vmatprep.subr.mxu0 0.0
        %1760 = vmatpush2.msra.mxu0 0.0
        %1761 = vmatprep.subr.mxu0 0.0
        %1762 = vmatpush2.msra.mxu0 0.0
        %1763 = vmatprep.subr.mxu0 0.0
        %1764 = vmatpush2.msra.mxu0 0.0
        %1765 = vmatprep.subr.mxu0 0.0
        %1766 = vmatpush2.msra.mxu0 0.0
        %1767 = vmatprep.subr.mxu0 0.0
        %1768 = vmatpush2.msra.mxu0 0.0
        %1769 = vmatprep.subr.mxu0 0.0
        %1770 = vmatpush2.msra.mxu0 0.0
        %1771 = vmatprep.subr.mxu0 0.0
        %1772 = vmatpush2.msra.mxu0 0.0
        %1773 = vmatprep.subr.mxu0 0.0
        %1774 = vmatpush2.msra.mxu0 0.0
        %1775 = vmatprep.subr.mxu0 0.0
        %1776 = vmatpush2.msra.mxu0 0.0
        %1777 = vmatprep.subr.mxu0 0.0
        %1778 = vmatpush2.msra.mxu0 0.0
        %1779 = vmatprep.subr.mxu0 0.0
        %1780 = vmatpush2.msra.mxu0 0.0
        %1781 = vmatprep.subr.mxu0 0.0
        %1782 = vmatpush2.msra.mxu0 0.0
        %1783 = vmatprep.mubr.f32.mxu0 0.0
        %1784 = vmatmul.mubr.f32.gmra.mxu0 %v1694
        %v1785 = vpop.f32.mrf.mxu0
        %v1786 = vadd.f32 %v1717, %v1785
        %v1787 = vpop.f32.mrf.mxu0
        %1788 = vmatprep.mubr.f32.mxu0 0.0
        %1789 = vmatmul.mubr.f32.gmra.mxu0 %v1695
        %v1790 = vpop.f32.mrf.mxu0
        %v1791 = vadd.f32 %v1717, %v1790
        %v1792 = vpop.f32.mrf.mxu0
        %1793 = vdwg.mxu0
        %v1794 = vadd.f32 %v1786, %v793
        %v1795 = vadd.f32 %v1791, %v794
        %vm1796 = vcmp.lt.s32.totalorder %v1476, 16
        %vm1797 = vcmp.lt.s32.totalorder %v1477, 16
        %v1798 = vsel %vm1796, 1, 0
        %v1799 = vsel %vm1797, 1, 0
        %vm1800 = vcmp.eq.s32.totalorder %v1798, 1
        %vm1801 = vcmp.eq.s32.totalorder %v1799, 1
        %v1802 = vsel %vm1800, %v1794, 0.0
        %v1803 = vsel %vm1801, %v1795, 0.0
        %1804 = vst [vmem:[#allocation14] sm:$0xff] %v1802
        %1805 = vst [vmem:[#allocation14 + $0x8] sm:$0xff] %v1803
        // Predicated region
        $region109: #{_lambda_.1} parent=79 // pred_check
          %p1806 = pneg %p420
        $region110: #{_lambda_.1} parent=79 // pred_check_branch
          %1808 = sbr.rel (%p1806) target = $region112
        $region111: #{_lambda_.1} parent=79 // pred_region
          %s1810 = ssub.s32 256, 256
          %1811 = vsyncadd [#allocation5], %s1810
          %s1812 = sshll.u32 [#allocation14], 4
          %s1813 = int_to_ptr.vmem [resolvable:$true] %s1812
          %1818 = dma.vmem_to_hbm [thread:$0]  %s1813, 256, %s15, [#allocation5], 128, 128, 8
        $region112: #{_lambda_.1} parent=79 // pred_fallthru
          _
        // Predicated region
        $region113: #{_lambda_.1} parent=79 // pred_check
          %p1819 = pneg %p441
        $region114: #{_lambda_.1} parent=79 // pred_check_branch
          %1821 = sbr.rel (%p1819) target = $region116
        $region115: #{_lambda_.1} parent=79 // pred_region
          %s1823 = ssub.s32 512, 512
          %1824 = vsyncadd [#allocation16], %s1823
          %s1825 = sshll.u32 [#allocation15], 4
          %s1826 = int_to_ptr.vmem [resolvable:$true] %s1825
          %1831 = dma.vmem_to_hbm [thread:$0]  %s1826, 512, %s16, [#allocation16], 128, 128, 8
        $region116: #{_lambda_.1} parent=79 // pred_fallthru
          _
        // Predicated region
        $region117: #{_lambda_.1} parent=79 // pred_check
          %p1832 = pneg %p420
        $region118: #{_lambda_.1} parent=79 // pred_check_branch
          %1834 = sbr.rel (%p1832) target = $region120
        $region119: #{_lambda_.1} parent=79 // pred_region
          %1835 = dma.done [#allocation5], 256
        $region120: #{_lambda_.1} parent=79 // pred_fallthru
          _
        // Predicated region
        $region121: #{_lambda_.1} parent=79 // pred_check
          %p1836 = pneg %p441
        $region122: #{_lambda_.1} parent=79 // pred_check_branch
          %1838 = sbr.rel (%p1836) target = $region124
        $region123: #{_lambda_.1} parent=79 // pred_region
          %1839 = dma.done [#allocation16], 512
        $region124: #{_lambda_.1} parent=79 // pred_fallthru
          _
      $region80: #{_lambda_.1} parent=5 // pred_fallthru
        _
      %p1840 = scmp.le.s32.totalorder 2, %s37
      // Predicated region
      $region125: #{_lambda_.1} parent=5 // pred_check
        %p1841 = pneg %p1840
      $region126: #{_lambda_.1} parent=5 // pred_check_branch
        %1843 = sbr.rel (%p1841) target = $region128
      $region127: #{_lambda_.1} parent=5 // pred_region
        %s1844 = ssub.s32 %s37, 2
      $region128: #{_lambda_.1} parent=5 // pred_fallthru
        _
    $region6: #{_lambda_.1} parent=1 // loop_footer
      %s41 = sadd.s32 1, %s37
    $region7: #{_lambda_.1} parent=1 // loop_footer_branch
      %36 = sbr.rel target = $region3
    $region8: #{_lambda_.1} parent=1 // loop_exit
      _
    %1845 = vsyncpa [#allocation4], 1
    %s1846 = scalar_lea.sflag [#allocation4], 1
    %1847 = vsyncpa %s1846, 1
    %1848 = vsyncpa [#allocation7], 1
    %s1849 = scalar_lea.sflag [#allocation7], 1
    %1850 = vsyncpa %s1849, 1
    %1851 = vsyncpa [#allocation10], 1
    %s1852 = scalar_lea.sflag [#allocation10], 1
    %1853 = vsyncpa %s1852, 1
    %1854 = vsyncpa [#allocation13], 1
    %s1855 = scalar_lea.sflag [#allocation13], 1
    %1856 = vsyncpa %s1855, 1
    %1857 = vsyncpa [#allocation5], 1
    %s1858 = scalar_lea.sflag [#allocation5], 1
    %1859 = vsyncpa %s1858, 1
    %1860 = vsyncpa [#allocation16], 1

</llo_original>
